<compile_context>
chip_gen: v5e
topology: v5e:2x2
jax: 0.10.0
libtpu: 0.0.40
codegen_flags: <defaults>
</compile_context>

<pallas_src>
import functools

import jax
import jax.numpy as jnp
import numpy as np
from jax import lax
from jax.experimental import pallas as pl
from jax.experimental.pallas import tpu as pltpu


def transformer_block_kernel(
    x_ref,      # (block_b, T, Kp) f32
    rseg_ref,   # (rows, 1) i32   row -> sequence id (only read when block_b > 1)
    cseg_ref,   # (1, rows) i32   col -> sequence id (only read when block_b > 1)
    wqkv_ref,   # (3*H*kd, Kp)    matmul dtype; Wq pre-scaled by 1/sqrt(kd), pre-transposed
    wu_ref,     # (Kp, H*kd)      matmul dtype; unifyheads.weight padded + transposed
    bu_ref,     # (1, Kp) f32
    g1_ref,     # (1, Kp) f32
    bn1_ref,    # (1, Kp) f32
    w1_ref,     # (Kp, Hp)        matmul dtype
    b1_ref,     # (1, Hp) f32
    w2_ref,     # (Hp, Kp)        matmul dtype
    b2_ref,     # (1, Kp) f32
    g2_ref,     # (1, Kp) f32
    bn2_ref,    # (1, Kp) f32
    o_ref,      # (block_b, T, Kp) f32
    *,
    heads: int,
    kdim: int,
    k_real: int,
    block_b: int,
    block_t: int,
    matmul_dtype,
    approx_recip: bool,
):
    rows = block_b * block_t
    hk = heads * kdim
    kp = x_ref.shape[-1]

    x = x_ref[...].reshape(rows, kp)                 # (rows, Kp) f32, batch folded into M
    xt = x.astype(matmul_dtype).T                    # (Kp, rows) -- the only pre-attn transpose

    # ---- fused QKV projection, head-major from the start ----
    qkv_t = jnp.dot(wqkv_ref[...], xt,
                    preferred_element_type=jnp.float32)      # (3HK, rows) f32

    q_t = qkv_t[:hk].reshape(heads, kdim, rows).astype(matmul_dtype)
    k_t = qkv_t[hk:2 * hk].reshape(heads, kdim, rows).astype(matmul_dtype)
    v_t = qkv_t[2 * hk:].reshape(heads, kdim, rows).astype(matmul_dtype)

    # ---- head-batched attention (contract kdim of both operands, no transposes) ----
    scores = lax.dot_general(q_t, k_t, (((1,), (1,)), ((0,), (0,))),
                             preferred_element_type=jnp.float32)  # (H, rows, rows) f32

    if block_b > 1:
        # rebuild the cross-batch mask in-kernel from tiny seg-id vectors (no rows^2 DMA)
        same = rseg_ref[...] == cseg_ref[...]                  # (rows, rows) bool
        scores = jnp.where(same[None], scores, -1e9)

    scores = scores - jnp.max(scores, axis=-1, keepdims=True)
    e = jnp.exp(scores)
    denom = jnp.sum(e, axis=-1, keepdims=True)
    if approx_recip:
        p = e * pl.reciprocal(denom, approx=True)              # EUP, low-precision path
    else:
        p = e / denom                                          # exact f32 golden path

    # attn @ V in transposed (H, kdim, rows) orientation -> reshape to (HK, rows) is free
    out_t = lax.dot_general(v_t, p.astype(matmul_dtype),
                            (((2,), (2,)), ((0,), (0,))),
                            preferred_element_type=jnp.float32)  # (H, kdim, rows) f32
    out_flat = out_t.reshape(hk, rows).astype(matmul_dtype)       # (HK, rows)

    # ---- unify heads: ONE 256-deep contraction, then a single 2-D transpose back ----
    att_t = jnp.dot(wu_ref[...], out_flat,
                    preferred_element_type=jnp.float32)           # (Kp, rows) f32
    att = att_t.T + bu_ref[...]                                   # (rows, Kp) f32

    # ---- LayerNorm over the TRUE feature count (padded columns are exactly zero) ----
    if kp != k_real:
        col = lax.broadcasted_iota(jnp.int32, (rows, kp), 1)
        feat_mask = col < k_real
    else:
        feat_mask = None
    inv_k = 1.0 / k_real

    def layernorm(v, gamma, beta, eps=1e-5):
        mu = jnp.sum(v, axis=-1, keepdims=True) * inv_k
        d = v - mu
        if feat_mask is not None:
            d = jnp.where(feat_mask, d, 0.0)
        var = jnp.sum(d * d, axis=-1, keepdims=True) * inv_k
        return d * lax.rsqrt(var + eps) * gamma + beta            # padded cols -> 0

    x1 = layernorm(att + x, g1_ref[...], bn1_ref[...])            # (rows, Kp)

    # ---- MLP (Linear -> ReLU -> Linear), wide lane-dense matmuls ----
    h1 = jnp.dot(x1.astype(matmul_dtype), w1_ref[...],
                 preferred_element_type=jnp.float32) + b1_ref[...]
    h1 = jnp.maximum(h1, 0.0)
    mlp = jnp.dot(h1.astype(matmul_dtype), w2_ref[...],
                  preferred_element_type=jnp.float32) + b2_ref[...]

    x2 = layernorm(mlp + x1, g2_ref[...], bn2_ref[...])

    # Kp = 128 -> unmasked, lane-dense stores.
    o_ref[...] = x2.reshape(block_b, block_t, kp).astype(o_ref.dtype)


def _round_up(n, m):
    return ((n + m - 1) // m) * m


def _pad_axis(a, axis, new_size):
    pad = new_size - a.shape[axis]
    if pad <= 0:
        return a
    widths = [(0, 0)] * a.ndim
    widths[axis] = (0, pad)
    return jnp.pad(a, widths)


def _const_spec(a):
    """Full-array, constant-index BlockSpec; single-buffered when supported."""
    nd = a.ndim
    idx = lambda i, _nd=nd: (0,) * _nd
    try:
        return pl.BlockSpec(a.shape, idx, pipeline_mode=pl.Buffered(1))
    except (AttributeError, TypeError):   # older jax without pipeline_mode / Buffered
        return pl.BlockSpec(a.shape, idx)


def transformer_block(x, params, *, heads: int, kdim: int,
                      block_b=None, matmul_dtype=jnp.float32):
    B, T, K = x.shape
    assert K == kdim
    hk = heads * kdim
    assert params["wu"].shape == (hk, K)
    kp = _round_up(K, 128)        # lane-dense model dim
    hp = _round_up(4 * K, 128)    # lane-dense MLP hidden dim

    # ---- block / grid choice: fill the MXU M dim, keep >= 2 grid steps (v7x 2 TCs) ----
    if block_b is None:
        rows_target = 256
        block_b = max(1, min(B, rows_target // max(T, 1)))
        if B >= 2:
            block_b = min(block_b, max(1, B // 2))
    grid_b = pl.cdiv(B, block_b)
    b_pad = grid_b * block_b      # pad awkward B instead of shrinking block_b to 1
    rows = block_b * T

    # ---- trace-time weight prep (fuse, scale-fold, pad, transpose, cast) ----
    scale = 1.0 / (kdim ** 0.5)
    wqkv = jnp.concatenate([params["wq"] * scale, params["wk"], params["wv"]], axis=1)
    wqkv_t = _pad_axis(wqkv, 0, kp).T.astype(matmul_dtype)            # (3HK, Kp)
    wu_t = _pad_axis(params["wu"], 1, kp).T.astype(matmul_dtype)      # (Kp, HK)
    w1 = _pad_axis(_pad_axis(params["w1"], 0, kp), 1, hp).astype(matmul_dtype)  # (Kp, Hp)
    w2 = _pad_axis(_pad_axis(params["w2"], 0, hp), 1, kp).astype(matmul_dtype)  # (Hp, Kp)

    bu = _pad_axis(params["bu"], 1, kp)
    b1 = _pad_axis(params["b1"], 1, hp)
    b2 = _pad_axis(params["b2"], 1, kp)
    g1 = _pad_axis(params["g1"], 1, kp)
    bn1 = _pad_axis(params["bn1"], 1, kp)
    g2 = _pad_axis(params["g2"], 1, kp)
    bn2 = _pad_axis(params["bn2"], 1, kp)

    # zero-pad activations: features to Kp, batch to a multiple of block_b
    xp = _pad_axis(_pad_axis(x, 2, kp), 0, b_pad)                     # (b_pad, T, Kp)

    # tiny per-row sequence ids -- lets the kernel rebuild the cross-batch mask itself
    seg = jnp.arange(rows, dtype=jnp.int32) // T
    rseg = seg.reshape(rows, 1)
    cseg = seg.reshape(1, rows)

    kernel = functools.partial(
        transformer_block_kernel,
        heads=heads, kdim=kdim, k_real=K, block_b=block_b, block_t=T,
        matmul_dtype=matmul_dtype,
        approx_recip=(jnp.dtype(matmul_dtype) != jnp.dtype(jnp.float32)),
    )

    out = pl.pallas_call(
        kernel,
        out_shape=jax.ShapeDtypeStruct((b_pad, T, kp), jnp.float32),
        grid=(grid_b,),
        in_specs=[
            pl.BlockSpec((block_b, T, kp), lambda i: (i, 0, 0)),      # x (pipelined)
            _const_spec(rseg), _const_spec(cseg),
            _const_spec(wqkv_t), _const_spec(wu_t), _const_spec(bu),
            _const_spec(g1), _const_spec(bn1),
            _const_spec(w1), _const_spec(b1),
            _const_spec(w2), _const_spec(b2),
            _const_spec(g2), _const_spec(bn2),
        ],
        out_specs=pl.BlockSpec((block_b, T, kp), lambda i: (i, 0, 0)),
        compiler_params=pltpu.CompilerParams(
            dimension_semantics=("parallel",),
            vmem_limit_bytes=32 * 1024 * 1024,
        ),
    )(
        xp, rseg, cseg,
        wqkv_t, wu_t, bu,
        g1, bn1, w1, b1, w2, b2, g2, bn2,
    )
    return out[:B, :, :K]


def make_params(key, kdim: int, heads: int):
    """Deterministic synthetic parameters, stored pre-transposed (x @ W form)."""
    ks = jax.random.split(key, 13)
    hk = heads * kdim

    def lin(k_, fan_in, shape):
        return jax.random.normal(k_, shape, jnp.float32) / np.sqrt(fan_in)

    return {
        "wq": lin(ks[0], kdim, (kdim, hk)),
        "wk": lin(ks[1], kdim, (kdim, hk)),
        "wv": lin(ks[2], kdim, (kdim, hk)),
        "wu": lin(ks[3], hk, (hk, kdim)),
        "bu": 0.1 * jax.random.normal(ks[4], (1, kdim), jnp.float32),
        "g1": 1.0 + 0.1 * jax.random.normal(ks[5], (1, kdim), jnp.float32),
        "bn1": 0.1 * jax.random.normal(ks[6], (1, kdim), jnp.float32),
        "g2": 1.0 + 0.1 * jax.random.normal(ks[7], (1, kdim), jnp.float32),
        "bn2": 0.1 * jax.random.normal(ks[8], (1, kdim), jnp.float32),
        "w1": lin(ks[9], kdim, (kdim, 4 * kdim)),
        "b1": 0.1 * jax.random.normal(ks[10], (1, 4 * kdim), jnp.float32),
        "w2": lin(ks[11], 4 * kdim, (4 * kdim, kdim)),
        "b2": 0.1 * jax.random.normal(ks[12], (1, kdim), jnp.float32),
    }


def transformer_block_ref(x, p, *, heads: int, kdim: int):
    """Pure-JAX f32 reference mirroring the PyTorch forward."""
    b, t, k = x.shape
    q = (x @ p["wq"]).reshape(b, t, heads, k)
    kk = (x @ p["wk"]).reshape(b, t, heads, k)
    v = (x @ p["wv"]).reshape(b, t, heads, k)
    q = jnp.transpose(q, (0, 2, 1, 3)).reshape(b * heads, t, k) / (k ** 0.25)
    kk = jnp.transpose(kk, (0, 2, 1, 3)).reshape(b * heads, t, k) / (k ** 0.25)
    v = jnp.transpose(v, (0, 2, 1, 3)).reshape(b * heads, t, k)
    dot = jax.nn.softmax(jnp.einsum("btk,bsk->bts", q, kk), axis=-1)
    out = jnp.einsum("bts,bsk->btk", dot, v).reshape(b, heads, t, k)
    out = jnp.transpose(out, (0, 2, 1, 3)).reshape(b, t, heads * k)
    out = out @ p["wu"] + p["bu"]

    def ln(vv, g, bb, eps=1e-5):
        mu = jnp.mean(vv, axis=-1, keepdims=True)
        var = jnp.mean((vv - mu) ** 2, axis=-1, keepdims=True)
        return (vv - mu) * lax.rsqrt(var + eps) * g + bb

    x1 = ln(out + x, p["g1"], p["bn1"])
    h = jax.nn.relu(x1 @ p["w1"] + p["b1"])
    mlp_out = h @ p["w2"] + p["b2"]
    return ln(mlp_out + x1, p["g2"], p["bn2"])


if __name__ == "__main__":
    K, HEADS = 32, 8
    B, T = 2, 8

    key = jax.random.PRNGKey(0)
    k_x, k_p = jax.random.split(key)
    x = jax.random.normal(k_x, (B, T, K), jnp.float32)
    params = make_params(k_p, K, HEADS)

    ref = transformer_block_ref(x, params, heads=HEADS, kdim=K)

    # Exact f32 path (default). The bf16-matmul path (matmul_dtype=jnp.bfloat16) is kept
    # opt-in for real-TPU runs only: CPU/interpret backends cannot execute
    # BF16 x BF16 = F32 dots (the failure in the previous revision).
    out = jax.block_until_ready(
        transformer_block(x, params, heads=HEADS, kdim=K))
    np.testing.assert_allclose(np.asarray(out), np.asarray(ref), rtol=2e-3, atol=2e-3)

    print("KERNEL_OK")
</pallas_src>

<mosaic_0001>
module attributes {stable_mosaic.version = 11 : i64} {
  func.func @transformer_block_kernel(%arg0: i32, %arg1: memref<1x8x128xf32, #tpu.memory_space<vmem>>, %arg2: memref<8x1xi32, #tpu.memory_space<vmem>>, %arg3: memref<1x8xi32, #tpu.memory_space<vmem>>, %arg4: memref<768x128xf32, #tpu.memory_space<vmem>>, %arg5: memref<128x256xf32, #tpu.memory_space<vmem>>, %arg6: memref<1x128xf32, #tpu.memory_space<vmem>>, %arg7: memref<1x128xf32, #tpu.memory_space<vmem>>, %arg8: memref<1x128xf32, #tpu.memory_space<vmem>>, %arg9: memref<128x128xf32, #tpu.memory_space<vmem>>, %arg10: memref<1x128xf32, #tpu.memory_space<vmem>>, %arg11: memref<128x128xf32, #tpu.memory_space<vmem>>, %arg12: memref<1x128xf32, #tpu.memory_space<vmem>>, %arg13: memref<1x128xf32, #tpu.memory_space<vmem>>, %arg14: memref<1x128xf32, #tpu.memory_space<vmem>>, %arg15: memref<1x8x128xf32, #tpu.memory_space<vmem>>) attributes {dimension_semantics = [#tpu.dimension_semantics<parallel>], iteration_bounds = array<i64: 2>, scalar_prefetch = 0 : i64, scratch_operands = 0 : i64, tpu.core_type = #tpu.core_type<tc>, window_params = [{transform_indices = @transform_0, window_bounds = array<i64: 1, 8, 128>}, {pipeline_mode = #tpu.pipeline_mode<synchronous>, transform_indices = @transform_1, window_bounds = array<i64: 8, 1>}, {pipeline_mode = #tpu.pipeline_mode<synchronous>, transform_indices = @transform_2, window_bounds = array<i64: 1, 8>}, {pipeline_mode = #tpu.pipeline_mode<synchronous>, transform_indices = @transform_3, window_bounds = array<i64: 768, 128>}, {pipeline_mode = #tpu.pipeline_mode<synchronous>, transform_indices = @transform_4, window_bounds = array<i64: 128, 256>}, {pipeline_mode = #tpu.pipeline_mode<synchronous>, transform_indices = @transform_5, window_bounds = array<i64: 1, 128>}, {pipeline_mode = #tpu.pipeline_mode<synchronous>, transform_indices = @transform_6, window_bounds = array<i64: 1, 128>}, {pipeline_mode = #tpu.pipeline_mode<synchronous>, transform_indices = @transform_7, window_bounds = array<i64: 1, 128>}, {pipeline_mode = #tpu.pipeline_mode<synchronous>, transform_indices = @transform_8, window_bounds = array<i64: 128, 128>}, {pipeline_mode = #tpu.pipeline_mode<synchronous>, transform_indices = @transform_9, window_bounds = array<i64: 1, 128>}, {pipeline_mode = #tpu.pipeline_mode<synchronous>, transform_indices = @transform_10, window_bounds = array<i64: 128, 128>}, {pipeline_mode = #tpu.pipeline_mode<synchronous>, transform_indices = @transform_11, window_bounds = array<i64: 1, 128>}, {pipeline_mode = #tpu.pipeline_mode<synchronous>, transform_indices = @transform_12, window_bounds = array<i64: 1, 128>}, {pipeline_mode = #tpu.pipeline_mode<synchronous>, transform_indices = @transform_13, window_bounds = array<i64: 1, 128>}, {transform_indices = @transform_14, window_bounds = array<i64: 1, 8, 128>}]} {
    %c0 = arith.constant 0 : index
    %c0_0 = arith.constant 0 : index
    %c0_1 = arith.constant 0 : index
    %0 = vector.load %arg1[%c0, %c0_0, %c0_1] : memref<1x8x128xf32, #tpu.memory_space<vmem>>, vector<1x8x128xf32>
    %1 = vector.shape_cast %0 : vector<1x8x128xf32> to vector<8x128xf32>
    %2 = tpu.transpose %1, [1, 0] : vector<8x128xf32> -> vector<128x8xf32>
    %c0_2 = arith.constant 0 : index
    %c0_3 = arith.constant 0 : index
    %3 = vector.load %arg4[%c0_2, %c0_3] : memref<768x128xf32, #tpu.memory_space<vmem>>, vector<768x128xf32>
    %cst = arith.constant dense<0.000000e+00> : vector<768x8xf32>
    %4 = tpu.matmul %3, %2, %cst {dimension_numbers = #tpu.dot_dimension_numbers<[1], [0], [0], [1], [0, 0, 1, 1], [], []>} : vector<768x128xf32>, vector<128x8xf32>, vector<768x8xf32> -> vector<768x8xf32>
    %5 = vector.extract_strided_slice %4 {offsets = [0, 0], sizes = [256, 8], strides = [1, 1]} : vector<768x8xf32> to vector<256x8xf32>
    %6 = vector.shape_cast %5 : vector<256x8xf32> to vector<8x32x8xf32>
    %7 = vector.extract_strided_slice %4 {offsets = [256, 0], sizes = [256, 8], strides = [1, 1]} : vector<768x8xf32> to vector<256x8xf32>
    %8 = vector.shape_cast %7 : vector<256x8xf32> to vector<8x32x8xf32>
    %9 = vector.extract_strided_slice %4 {offsets = [512, 0], sizes = [256, 8], strides = [1, 1]} : vector<768x8xf32> to vector<256x8xf32>
    %10 = vector.shape_cast %9 : vector<256x8xf32> to vector<8x32x8xf32>
    %cst_4 = arith.constant dense<0.000000e+00> : vector<8x8x8xf32>
    %11 = tpu.matmul %6, %8, %cst_4 {dimension_numbers = #tpu.dot_dimension_numbers<[1], [1], [2], [2], [0, 0, 0, 2, 1, 2], [0], [0]>} : vector<8x32x8xf32>, vector<8x32x8xf32>, vector<8x8x8xf32> -> vector<8x8x8xf32>
    %cst_5 = arith.constant dense<0xFF800000> : vector<8x8xf32>
    %12 = vector.multi_reduction <maximumf>, %11, %cst_5 [2] : vector<8x8x8xf32> to vector<8x8xf32>
    %13 = vector.shape_cast %12 : vector<8x8xf32> to vector<8x8x1xf32>
    %14 = vector.broadcast %13 : vector<8x8x1xf32> to vector<8x8x8xf32>
    %15 = arith.subf %11, %14 : vector<8x8x8xf32>
    %16 = math.exp %15 : vector<8x8x8xf32>
    %cst_6 = arith.constant dense<0.000000e+00> : vector<8x8xf32>
    %17 = vector.multi_reduction <add>, %16, %cst_6 [2] : vector<8x8x8xf32> to vector<8x8xf32>
    %18 = vector.shape_cast %17 : vector<8x8xf32> to vector<8x8x1xf32>
    %19 = vector.broadcast %18 : vector<8x8x1xf32> to vector<8x8x8xf32>
    %20 = arith.divf %16, %19 : vector<8x8x8xf32>
    %cst_7 = arith.constant dense<0.000000e+00> : vector<8x32x8xf32>
    %21 = tpu.matmul %10, %20, %cst_7 {dimension_numbers = #tpu.dot_dimension_numbers<[2], [2], [1], [1], [0, 0, 0, 1, 1, 1], [0], [0]>} : vector<8x32x8xf32>, vector<8x8x8xf32>, vector<8x32x8xf32> -> vector<8x32x8xf32>
    %22 = vector.shape_cast %21 : vector<8x32x8xf32> to vector<256x8xf32>
    %c0_8 = arith.constant 0 : index
    %c0_9 = arith.constant 0 : index
    %23 = vector.load %arg5[%c0_8, %c0_9] : memref<128x256xf32, #tpu.memory_space<vmem>>, vector<128x256xf32>
    %cst_10 = arith.constant dense<0.000000e+00> : vector<128x8xf32>
    %24 = tpu.matmul %23, %22, %cst_10 {dimension_numbers = #tpu.dot_dimension_numbers<[1], [0], [0], [1], [0, 0, 1, 1], [], []>} : vector<128x256xf32>, vector<256x8xf32>, vector<128x8xf32> -> vector<128x8xf32>
    %25 = tpu.transpose %24, [1, 0] : vector<128x8xf32> -> vector<8x128xf32>
    %c0_11 = arith.constant 0 : index
    %c0_12 = arith.constant 0 : index
    %26 = vector.load %arg6[%c0_11, %c0_12] : memref<1x128xf32, #tpu.memory_space<vmem>>, vector<1x128xf32>
    %27 = vector.broadcast %26 : vector<1x128xf32> to vector<8x128xf32>
    %28 = arith.addf %25, %27 : vector<8x128xf32>
    %29 = tpu.iota {dimensions = array<i32: 1>} : vector<8x128xi32>
    %c32_i32 = arith.constant 32 : i32
    %30 = vector.broadcast %c32_i32 : i32 to vector<8x128xi32>
    %31 = arith.cmpi slt, %29, %30 : vector<8x128xi32>
    %32 = arith.addf %28, %1 : vector<8x128xf32>
    %c0_13 = arith.constant 0 : index
    %c0_14 = arith.constant 0 : index
    %33 = vector.load %arg7[%c0_13, %c0_14] : memref<1x128xf32, #tpu.memory_space<vmem>>, vector<1x128xf32>
    %c0_15 = arith.constant 0 : index
    %c0_16 = arith.constant 0 : index
    %34 = vector.load %arg8[%c0_15, %c0_16] : memref<1x128xf32, #tpu.memory_space<vmem>>, vector<1x128xf32>
    %cst_17 = arith.constant dense<0.000000e+00> : vector<8xf32>
    %35 = vector.multi_reduction <add>, %32, %cst_17 [1] : vector<8x128xf32> to vector<8xf32>
    %36 = vector.shape_cast %35 : vector<8xf32> to vector<8x1xf32>
    %cst_18 = arith.constant 3.125000e-02 : f32
    %37 = vector.broadcast %cst_18 : f32 to vector<8x1xf32>
    %38 = arith.mulf %36, %37 : vector<8x1xf32>
    %39 = vector.broadcast %38 : vector<8x1xf32> to vector<8x128xf32>
    %40 = arith.subf %32, %39 : vector<8x128xf32>
    %cst_19 = arith.constant 0.000000e+00 : f32
    %41 = vector.broadcast %cst_19 : f32 to vector<8x128xf32>
    %42 = arith.select %31, %40, %41 : vector<8x128xi1>, vector<8x128xf32>
    %43 = arith.mulf %42, %42 : vector<8x128xf32>
    %cst_20 = arith.constant dense<0.000000e+00> : vector<8xf32>
    %44 = vector.multi_reduction <add>, %43, %cst_20 [1] : vector<8x128xf32> to vector<8xf32>
    %45 = vector.shape_cast %44 : vector<8xf32> to vector<8x1xf32>
    %cst_21 = arith.constant 3.125000e-02 : f32
    %46 = vector.broadcast %cst_21 : f32 to vector<8x1xf32>
    %47 = arith.mulf %45, %46 : vector<8x1xf32>
    %cst_22 = arith.constant 9.99999974E-6 : f32
    %48 = vector.broadcast %cst_22 : f32 to vector<8x1xf32>
    %49 = arith.addf %47, %48 : vector<8x1xf32>
    %50 = math.rsqrt %49 : vector<8x1xf32>
    %51 = vector.broadcast %50 : vector<8x1xf32> to vector<8x128xf32>
    %52 = arith.mulf %42, %51 : vector<8x128xf32>
    %53 = vector.broadcast %33 : vector<1x128xf32> to vector<8x128xf32>
    %54 = arith.mulf %52, %53 : vector<8x128xf32>
    %55 = vector.broadcast %34 : vector<1x128xf32> to vector<8x128xf32>
    %56 = arith.addf %54, %55 : vector<8x128xf32>
    %c0_23 = arith.constant 0 : index
    %c0_24 = arith.constant 0 : index
    %57 = vector.load %arg9[%c0_23, %c0_24] : memref<128x128xf32, #tpu.memory_space<vmem>>, vector<128x128xf32>
    %cst_25 = arith.constant dense<0.000000e+00> : vector<8x128xf32>
    %58 = tpu.matmul %56, %57, %cst_25 {dimension_numbers = #tpu.dot_dimension_numbers<[1], [0], [0], [1], [0, 0, 1, 1], [], []>} : vector<8x128xf32>, vector<128x128xf32>, vector<8x128xf32> -> vector<8x128xf32>
    %c0_26 = arith.constant 0 : index
    %c0_27 = arith.constant 0 : index
    %59 = vector.load %arg10[%c0_26, %c0_27] : memref<1x128xf32, #tpu.memory_space<vmem>>, vector<1x128xf32>
    %60 = vector.broadcast %59 : vector<1x128xf32> to vector<8x128xf32>
    %61 = arith.addf %58, %60 : vector<8x128xf32>
    %cst_28 = arith.constant 0.000000e+00 : f32
    %62 = vector.broadcast %cst_28 : f32 to vector<8x128xf32>
    %63 = arith.maximumf %61, %62 : vector<8x128xf32>
    %c0_29 = arith.constant 0 : index
    %c0_30 = arith.constant 0 : index
    %64 = vector.load %arg11[%c0_29, %c0_30] : memref<128x128xf32, #tpu.memory_space<vmem>>, vector<128x128xf32>
    %cst_31 = arith.constant dense<0.000000e+00> : vector<8x128xf32>
    %65 = tpu.matmul %63, %64, %cst_31 {dimension_numbers = #tpu.dot_dimension_numbers<[1], [0], [0], [1], [0, 0, 1, 1], [], []>} : vector<8x128xf32>, vector<128x128xf32>, vector<8x128xf32> -> vector<8x128xf32>
    %c0_32 = arith.constant 0 : index
    %c0_33 = arith.constant 0 : index
    %66 = vector.load %arg12[%c0_32, %c0_33] : memref<1x128xf32, #tpu.memory_space<vmem>>, vector<1x128xf32>
    %67 = vector.broadcast %66 : vector<1x128xf32> to vector<8x128xf32>
    %68 = arith.addf %65, %67 : vector<8x128xf32>
    %69 = arith.addf %68, %56 : vector<8x128xf32>
    %c0_34 = arith.constant 0 : index
    %c0_35 = arith.constant 0 : index
    %70 = vector.load %arg13[%c0_34, %c0_35] : memref<1x128xf32, #tpu.memory_space<vmem>>, vector<1x128xf32>
    %c0_36 = arith.constant 0 : index
    %c0_37 = arith.constant 0 : index
    %71 = vector.load %arg14[%c0_36, %c0_37] : memref<1x128xf32, #tpu.memory_space<vmem>>, vector<1x128xf32>
    %cst_38 = arith.constant dense<0.000000e+00> : vector<8xf32>
    %72 = vector.multi_reduction <add>, %69, %cst_38 [1] : vector<8x128xf32> to vector<8xf32>
    %73 = vector.shape_cast %72 : vector<8xf32> to vector<8x1xf32>
    %cst_39 = arith.constant 3.125000e-02 : f32
    %74 = vector.broadcast %cst_39 : f32 to vector<8x1xf32>
    %75 = arith.mulf %73, %74 : vector<8x1xf32>
    %76 = vector.broadcast %75 : vector<8x1xf32> to vector<8x128xf32>
    %77 = arith.subf %69, %76 : vector<8x128xf32>
    %cst_40 = arith.constant 0.000000e+00 : f32
    %78 = vector.broadcast %cst_40 : f32 to vector<8x128xf32>
    %79 = arith.select %31, %77, %78 : vector<8x128xi1>, vector<8x128xf32>
    %80 = arith.mulf %79, %79 : vector<8x128xf32>
    %cst_41 = arith.constant dense<0.000000e+00> : vector<8xf32>
    %81 = vector.multi_reduction <add>, %80, %cst_41 [1] : vector<8x128xf32> to vector<8xf32>
    %82 = vector.shape_cast %81 : vector<8xf32> to vector<8x1xf32>
    %cst_42 = arith.constant 3.125000e-02 : f32
    %83 = vector.broadcast %cst_42 : f32 to vector<8x1xf32>
    %84 = arith.mulf %82, %83 : vector<8x1xf32>
    %cst_43 = arith.constant 9.99999974E-6 : f32
    %85 = vector.broadcast %cst_43 : f32 to vector<8x1xf32>
    %86 = arith.addf %84, %85 : vector<8x1xf32>
    %87 = math.rsqrt %86 : vector<8x1xf32>
    %88 = vector.broadcast %87 : vector<8x1xf32> to vector<8x128xf32>
    %89 = arith.mulf %79, %88 : vector<8x128xf32>
    %90 = vector.broadcast %70 : vector<1x128xf32> to vector<8x128xf32>
    %91 = arith.mulf %89, %90 : vector<8x128xf32>
    %92 = vector.broadcast %71 : vector<1x128xf32> to vector<8x128xf32>
    %93 = arith.addf %91, %92 : vector<8x128xf32>
    %94 = vector.shape_cast %93 : vector<8x128xf32> to vector<1x8x128xf32>
    %c0_44 = arith.constant 0 : index
    %c0_45 = arith.constant 0 : index
    %c0_46 = arith.constant 0 : index
    %95 = vector.load %arg15[%c0_44, %c0_45, %c0_46] : memref<1x8x128xf32, #tpu.memory_space<vmem>>, vector<1x8x128xf32>
    tpu.vector_store %arg15[%c0_44, %c0_45, %c0_46], %94 {strides = array<i32>} : memref<1x8x128xf32, #tpu.memory_space<vmem>>, vector<1x8x128xf32>,
    return
  }
  func.func @transform_0(%arg0: i32) -> (i32, i32, i32) {
    %c0_i32 = arith.constant 0 : i32
    %c0_i32_0 = arith.constant 0 : i32
    %c0_i32_1 = arith.constant 0 : i32
    return %arg0, %c0_i32, %c0_i32_0 : i32, i32, i32
  }
  func.func @transform_1(%arg0: i32) -> (i32, i32) {
    %c0_i32 = arith.constant 0 : i32
    %c0_i32_0 = arith.constant 0 : i32
    %c0_i32_1 = arith.constant 0 : i32
    return %c0_i32, %c0_i32_0 : i32, i32
  }
  func.func @transform_2(%arg0: i32) -> (i32, i32) {
    %c0_i32 = arith.constant 0 : i32
    %c0_i32_0 = arith.constant 0 : i32
    %c0_i32_1 = arith.constant 0 : i32
    return %c0_i32, %c0_i32_0 : i32, i32
  }
  func.func @transform_3(%arg0: i32) -> (i32, i32) {
    %c0_i32 = arith.constant 0 : i32
    %c0_i32_0 = arith.constant 0 : i32
    %c0_i32_1 = arith.constant 0 : i32
    return %c0_i32, %c0_i32_0 : i32, i32
  }
  func.func @transform_4(%arg0: i32) -> (i32, i32) {
    %c0_i32 = arith.constant 0 : i32
    %c0_i32_0 = arith.constant 0 : i32
    %c0_i32_1 = arith.constant 0 : i32
    return %c0_i32, %c0_i32_0 : i32, i32
  }
  func.func @transform_5(%arg0: i32) -> (i32, i32) {
    %c0_i32 = arith.constant 0 : i32
    %c0_i32_0 = arith.constant 0 : i32
    %c0_i32_1 = arith.constant 0 : i32
    return %c0_i32, %c0_i32_0 : i32, i32
  }
  func.func @transform_6(%arg0: i32) -> (i32, i32) {
    %c0_i32 = arith.constant 0 : i32
    %c0_i32_0 = arith.constant 0 : i32
    %c0_i32_1 = arith.constant 0 : i32
    return %c0_i32, %c0_i32_0 : i32, i32
  }
  func.func @transform_7(%arg0: i32) -> (i32, i32) {
    %c0_i32 = arith.constant 0 : i32
    %c0_i32_0 = arith.constant 0 : i32
    %c0_i32_1 = arith.constant 0 : i32
    return %c0_i32, %c0_i32_0 : i32, i32
  }
  func.func @transform_8(%arg0: i32) -> (i32, i32) {
    %c0_i32 = arith.constant 0 : i32
    %c0_i32_0 = arith.constant 0 : i32
    %c0_i32_1 = arith.constant 0 : i32
    return %c0_i32, %c0_i32_0 : i32, i32
  }
  func.func @transform_9(%arg0: i32) -> (i32, i32) {
    %c0_i32 = arith.constant 0 : i32
    %c0_i32_0 = arith.constant 0 : i32
    %c0_i32_1 = arith.constant 0 : i32
    return %c0_i32, %c0_i32_0 : i32, i32
  }
  func.func @transform_10(%arg0: i32) -> (i32, i32) {
    %c0_i32 = arith.constant 0 : i32
    %c0_i32_0 = arith.constant 0 : i32
    %c0_i32_1 = arith.constant 0 : i32
    return %c0_i32, %c0_i32_0 : i32, i32
  }
  func.func @transform_11(%arg0: i32) -> (i32, i32) {
    %c0_i32 = arith.constant 0 : i32
    %c0_i32_0 = arith.constant 0 : i32
    %c0_i32_1 = arith.constant 0 : i32
    return %c0_i32, %c0_i32_0 : i32, i32
  }
  func.func @transform_12(%arg0: i32) -> (i32, i32) {
    %c0_i32 = arith.constant 0 : i32
    %c0_i32_0 = arith.constant 0 : i32
    %c0_i32_1 = arith.constant 0 : i32
    return %c0_i32, %c0_i32_0 : i32, i32
  }
  func.func @transform_13(%arg0: i32) -> (i32, i32) {
    %c0_i32 = arith.constant 0 : i32
    %c0_i32_0 = arith.constant 0 : i32
    %c0_i32_1 = arith.constant 0 : i32
    return %c0_i32, %c0_i32_0 : i32, i32
  }
  func.func @transform_14(%arg0: i32) -> (i32, i32, i32) {
    %c0_i32 = arith.constant 0 : i32
    %c0_i32_0 = arith.constant 0 : i32
    %c0_i32_1 = arith.constant 0 : i32
    return %arg0, %c0_i32, %c0_i32_0 : i32, i32, i32
  }
}

</mosaic_0001>

<llo_original>
// kernel: tpu_custom_call.1
$region0: #{tpu_custom_call.1}
  #allocation0 [shape = 'u32[]', space=smem, size = 0x4, offset = 0x4, fixed_abs, tag = 'smem constant byte address 0x4 - core index']
  #allocation1 [shape = 'u32[72,128]{1,0:T(1,128)}', space=vmem, size = 0x9000, scoped, tag = 'internal scratch']
  %s0 = inlined_call_operand.hbm [shape: f32[2,8,128], index: 0, kind: input, shape index: {}]
  %s1 = inlined_call_operand.vmem [shape: s32[8,1], index: 1, kind: input, shape index: {}]
  %s2 = inlined_call_operand.vmem [shape: s32[1,8], index: 2, kind: input, shape index: {}]
  %s3 = inlined_call_operand.hbm [shape: f32[768,128], index: 3, kind: input, shape index: {}]
  %s4 = inlined_call_operand.hbm [shape: f32[128,256], index: 4, kind: input, shape index: {}]
  %s5 = inlined_call_operand.vmem [shape: f32[1,128], index: 5, kind: input, shape index: {}]
  %s6 = inlined_call_operand.vmem [shape: f32[1,128], index: 6, kind: input, shape index: {}]
  %s7 = inlined_call_operand.vmem [shape: f32[1,128], index: 7, kind: input, shape index: {}]
  %s8 = inlined_call_operand.hbm [shape: f32[128,128], index: 8, kind: input, shape index: {}]
  %s9 = inlined_call_operand.vmem [shape: f32[1,128], index: 9, kind: input, shape index: {}]
  %s10 = inlined_call_operand.hbm [shape: f32[128,128], index: 10, kind: input, shape index: {}]
  %s11 = inlined_call_operand.vmem [shape: f32[1,128], index: 11, kind: input, shape index: {}]
  %s12 = inlined_call_operand.vmem [shape: f32[1,128], index: 12, kind: input, shape index: {}]
  %s13 = inlined_call_operand.vmem [shape: f32[1,128], index: 13, kind: input, shape index: {}]
  %s14 = inlined_call_operand.hbm [shape: f32[2,8,128], index: 14, kind: output, shape index: {}]
  %s15 = sld [smem:[#allocation0]]
  $region109: #{tpu_custom_call.1} parent=0
    _
  %s17 = ssub.s32 1, %s15
  %s18 = scalar_select 0, %s17, %s15
  $region1: #{tpu_custom_call.1} parent=0
    #allocation2 [shape = 'u8[8192]{0}', space=vmem, size = 0x2000, scoped, tag = 'input window, operand 0']
    #allocation3 [shape = 's32[2]{0}', space=sflag, size = 0x8, scoped, tag = 'scoped memory for tpu_custom_call.1']
    #allocation4 [shape = 's32[2]{0}', space=sflag, size = 0x8, scoped, tag = 'scoped memory for tpu_custom_call.1']
    #allocation5 [shape = 'u8[393216]{0}', space=vmem, size = 0x60000, scoped, tag = 'input window, operand 3, single buffered']
    #allocation6 [shape = 's32[1]{0}', space=sflag, size = 0x4, scoped, tag = 'scoped memory for tpu_custom_call.1']
    #allocation7 [shape = 'u8[131072]{0}', space=vmem, size = 0x20000, scoped, tag = 'input window, operand 4, single buffered']
    #allocation8 [shape = 'u8[65536]{0}', space=vmem, size = 0x10000, scoped, tag = 'input window, operand 8, single buffered']
    #allocation9 [shape = 's32[1]{0}', space=sflag, size = 0x4, scoped, tag = 'scoped memory for tpu_custom_call.1']
    #allocation10 [shape = 'u8[65536]{0}', space=vmem, size = 0x10000, scoped, tag = 'input window, operand 10, single buffered']
    #allocation11 [shape = 'u8[8192]{0}', space=vmem, size = 0x2000, scoped, tag = 'output window, operand 0']
    %19 = vsyncpa [#allocation3], 0
    %s20 = scalar_lea.sflag [#allocation3], 1
    %21 = vsyncpa %s20, 0
    %22 = vsyncpa [#allocation6], 0
    %23 = vsyncpa [#allocation9], 0
    %24 = vsyncpa [#allocation4], 0
    %s25 = scalar_lea.sflag [#allocation4], 1
    %26 = vsyncpa %s25, 0
    loop: start=0, step=1, limit=4
    $region2: #{tpu_custom_call.1} parent=1 // loop_pre_header
      _
    $region3: #{tpu_custom_call.1} parent=1 // loop_header
      %s28 = sphi 0, %s32
      %p29 = scmp.ge.s32.totalorder %s28, 4
      %s38 = sphi 0, %s40
      %s41 = sphi 0, %s38
      %s42 = sphi 0, %s41
      %s58 = sphi 0, %s42
      %s62 = sphi 0, %s62
      %s64 = sphi 0, %s62
      %s65 = sphi 0, %s64
      %s79 = sphi 0, %s65
      %s83 = sphi 0, %s83
      %s85 = sphi 0, %s83
      %s86 = sphi 0, %s85
      %s100 = sphi 0, %s86
      %s104 = sphi 0, %s104
      %s106 = sphi 0, %s104
      %s107 = sphi 0, %s106
      %s121 = sphi 0, %s107
      %s125 = sphi 0, %s125
      %s127 = sphi 0, %s125
      %s128 = sphi 0, %s127
      %s142 = sphi 0, %s128
      %s146 = sphi 0, %s146
      %s148 = sphi 0, %s146
      %s149 = sphi 0, %s148
      %s163 = sphi 0, %s149
      %s167 = sphi 0, %s167
      %s169 = sphi 0, %s167
      %s170 = sphi 0, %s169
      %s184 = sphi 0, %s170
      %s188 = sphi 0, %s188
      %s190 = sphi 0, %s188
      %s191 = sphi 0, %s190
      %s205 = sphi 0, %s191
      %s209 = sphi 0, %s209
      %s211 = sphi 0, %s209
      %s212 = sphi 0, %s211
      %s226 = sphi 0, %s212
      %s230 = sphi 0, %s230
      %s232 = sphi 0, %s230
      %s233 = sphi 0, %s232
      %s247 = sphi 0, %s233
      %s251 = sphi 0, %s251
      %s253 = sphi 0, %s251
      %s254 = sphi 0, %s253
      %s268 = sphi 0, %s254
      %s272 = sphi 0, %s272
      %s274 = sphi 0, %s272
      %s275 = sphi 0, %s274
      %s289 = sphi 0, %s275
      %s293 = sphi 0, %s293
      %s295 = sphi 0, %s293
      %s296 = sphi 0, %s295
      %s310 = sphi 0, %s296
      %s314 = sphi 0, %s314
      %s316 = sphi 0, %s314
      %s317 = sphi 0, %s316
      %s331 = sphi 0, %s317
      %s337 = sphi 0, %s339
      %s340 = sphi 0, %s337
      %s341 = sphi 0, %s340
      %s357 = sphi 0, %s341
    $region4: #{tpu_custom_call.1} parent=1 // loop_header_branch
      %31 = sbr.rel (%p29) target = $region8
    $region5: #{tpu_custom_call.1} parent=1 // loop_body
      %s33 = ssub.s32 %s28, 1
      %s34 = ssub.s32 %s28, 2
      %s35 = sadd.s32 %s28, 1
      %s36 = ssub.s32 %s28, %s35
      %p37 = scmp.eq.s32.totalorder %s36, 0
      %s39 = sadd.s32 %s38, 1
      %s40 = scalar_select %p37, %s38, %s39
      %p43 = pneg %p37
      %p44 = scmp.eq.s32.totalorder %s28, 1
      %p45 = por %p43, %p44
      %p46 = scmp.ne.s32.totalorder %s38, %s41
      %p47 = scmp.eq.s32.totalorder %s28, 0
      %p48 = por %p46, %p47
      %p49 = scmp.ne.s32.totalorder %s38, %s41
      %p50 = scmp.eq.s32.totalorder %s33, 1
      %p51 = por %p49, %p50
      %p52 = scmp.ne.s32.totalorder %s41, %s42
      %p53 = scmp.eq.s32.totalorder %s33, 0
      %p54 = por %p52, %p53
      %p55 = scmp.ne.s32.totalorder %s41, %s42
      %p56 = scmp.eq.s32.totalorder %s34, 1
      %p57 = por %p55, %p56
      %p59 = scmp.ne.s32.totalorder %s42, %s58
      %p60 = scmp.eq.s32.totalorder %s34, 0
      %p61 = por %p59, %p60
      %s63 = sadd.s32 %s62, 1
      %p66 = scmp.eq.s32.totalorder %s28, 1
      %p67 = scmp.ne.s32.totalorder %s62, %s64
      %p68 = scmp.eq.s32.totalorder %s28, 0
      %p69 = por %p67, %p68
      %p70 = scmp.ne.s32.totalorder %s62, %s64
      %p71 = scmp.eq.s32.totalorder %s33, 1
      %p72 = por %p70, %p71
      %p73 = scmp.ne.s32.totalorder %s64, %s65
      %p74 = scmp.eq.s32.totalorder %s33, 0
      %p75 = por %p73, %p74
      %p76 = scmp.ne.s32.totalorder %s64, %s65
      %p77 = scmp.eq.s32.totalorder %s34, 1
      %p78 = por %p76, %p77
      %p80 = scmp.ne.s32.totalorder %s65, %s79
      %p81 = scmp.eq.s32.totalorder %s34, 0
      %p82 = por %p80, %p81
      %s84 = sadd.s32 %s83, 1
      %p87 = scmp.eq.s32.totalorder %s28, 1
      %p88 = scmp.ne.s32.totalorder %s83, %s85
      %p89 = scmp.eq.s32.totalorder %s28, 0
      %p90 = por %p88, %p89
      %p91 = scmp.ne.s32.totalorder %s83, %s85
      %p92 = scmp.eq.s32.totalorder %s33, 1
      %p93 = por %p91, %p92
      %p94 = scmp.ne.s32.totalorder %s85, %s86
      %p95 = scmp.eq.s32.totalorder %s33, 0
      %p96 = por %p94, %p95
      %p97 = scmp.ne.s32.totalorder %s85, %s86
      %p98 = scmp.eq.s32.totalorder %s34, 1
      %p99 = por %p97, %p98
      %p101 = scmp.ne.s32.totalorder %s86, %s100
      %p102 = scmp.eq.s32.totalorder %s34, 0
      %p103 = por %p101, %p102
      %s105 = sadd.s32 %s104, 1
      %p108 = scmp.eq.s32.totalorder %s28, 1
      %p109 = scmp.ne.s32.totalorder %s104, %s106
      %p110 = scmp.eq.s32.totalorder %s28, 0
      %p111 = por %p109, %p110
      %p112 = scmp.ne.s32.totalorder %s104, %s106
      %p113 = scmp.eq.s32.totalorder %s33, 1
      %p114 = por %p112, %p113
      %p115 = scmp.ne.s32.totalorder %s106, %s107
      %p116 = scmp.eq.s32.totalorder %s33, 0
      %p117 = por %p115, %p116
      %p118 = scmp.ne.s32.totalorder %s106, %s107
      %p119 = scmp.eq.s32.totalorder %s34, 1
      %p120 = por %p118, %p119
      %p122 = scmp.ne.s32.totalorder %s107, %s121
      %p123 = scmp.eq.s32.totalorder %s34, 0
      %p124 = por %p122, %p123
      %s126 = sadd.s32 %s125, 1
      %p129 = scmp.eq.s32.totalorder %s28, 1
      %p130 = scmp.ne.s32.totalorder %s125, %s127
      %p131 = scmp.eq.s32.totalorder %s28, 0
      %p132 = por %p130, %p131
      %p133 = scmp.ne.s32.totalorder %s125, %s127
      %p134 = scmp.eq.s32.totalorder %s33, 1
      %p135 = por %p133, %p134
      %p136 = scmp.ne.s32.totalorder %s127, %s128
      %p137 = scmp.eq.s32.totalorder %s33, 0
      %p138 = por %p136, %p137
      %p139 = scmp.ne.s32.totalorder %s127, %s128
      %p140 = scmp.eq.s32.totalorder %s34, 1
      %p141 = por %p139, %p140
      %p143 = scmp.ne.s32.totalorder %s128, %s142
      %p144 = scmp.eq.s32.totalorder %s34, 0
      %p145 = por %p143, %p144
      %s147 = sadd.s32 %s146, 1
      %p150 = scmp.eq.s32.totalorder %s28, 1
      %p151 = scmp.ne.s32.totalorder %s146, %s148
      %p152 = scmp.eq.s32.totalorder %s28, 0
      %p153 = por %p151, %p152
      %p154 = scmp.ne.s32.totalorder %s146, %s148
      %p155 = scmp.eq.s32.totalorder %s33, 1
      %p156 = por %p154, %p155
      %p157 = scmp.ne.s32.totalorder %s148, %s149
      %p158 = scmp.eq.s32.totalorder %s33, 0
      %p159 = por %p157, %p158
      %p160 = scmp.ne.s32.totalorder %s148, %s149
      %p161 = scmp.eq.s32.totalorder %s34, 1
      %p162 = por %p160, %p161
      %p164 = scmp.ne.s32.totalorder %s149, %s163
      %p165 = scmp.eq.s32.totalorder %s34, 0
      %p166 = por %p164, %p165
      %s168 = sadd.s32 %s167, 1
      %p171 = scmp.eq.s32.totalorder %s28, 1
      %p172 = scmp.ne.s32.totalorder %s167, %s169
      %p173 = scmp.eq.s32.totalorder %s28, 0
      %p174 = por %p172, %p173
      %p175 = scmp.ne.s32.totalorder %s167, %s169
      %p176 = scmp.eq.s32.totalorder %s33, 1
      %p177 = por %p175, %p176
      %p178 = scmp.ne.s32.totalorder %s169, %s170
      %p179 = scmp.eq.s32.totalorder %s33, 0
      %p180 = por %p178, %p179
      %p181 = scmp.ne.s32.totalorder %s169, %s170
      %p182 = scmp.eq.s32.totalorder %s34, 1
      %p183 = por %p181, %p182
      %p185 = scmp.ne.s32.totalorder %s170, %s184
      %p186 = scmp.eq.s32.totalorder %s34, 0
      %p187 = por %p185, %p186
      %s189 = sadd.s32 %s188, 1
      %p192 = scmp.eq.s32.totalorder %s28, 1
      %p193 = scmp.ne.s32.totalorder %s188, %s190
      %p194 = scmp.eq.s32.totalorder %s28, 0
      %p195 = por %p193, %p194
      %p196 = scmp.ne.s32.totalorder %s188, %s190
      %p197 = scmp.eq.s32.totalorder %s33, 1
      %p198 = por %p196, %p197
      %p199 = scmp.ne.s32.totalorder %s190, %s191
      %p200 = scmp.eq.s32.totalorder %s33, 0
      %p201 = por %p199, %p200
      %p202 = scmp.ne.s32.totalorder %s190, %s191
      %p203 = scmp.eq.s32.totalorder %s34, 1
      %p204 = por %p202, %p203
      %p206 = scmp.ne.s32.totalorder %s191, %s205
      %p207 = scmp.eq.s32.totalorder %s34, 0
      %p208 = por %p206, %p207
      %s210 = sadd.s32 %s209, 1
      %p213 = scmp.eq.s32.totalorder %s28, 1
      %p214 = scmp.ne.s32.totalorder %s209, %s211
      %p215 = scmp.eq.s32.totalorder %s28, 0
      %p216 = por %p214, %p215
      %p217 = scmp.ne.s32.totalorder %s209, %s211
      %p218 = scmp.eq.s32.totalorder %s33, 1
      %p219 = por %p217, %p218
      %p220 = scmp.ne.s32.totalorder %s211, %s212
      %p221 = scmp.eq.s32.totalorder %s33, 0
      %p222 = por %p220, %p221
      %p223 = scmp.ne.s32.totalorder %s211, %s212
      %p224 = scmp.eq.s32.totalorder %s34, 1
      %p225 = por %p223, %p224
      %p227 = scmp.ne.s32.totalorder %s212, %s226
      %p228 = scmp.eq.s32.totalorder %s34, 0
      %p229 = por %p227, %p228
      %s231 = sadd.s32 %s230, 1
      %p234 = scmp.eq.s32.totalorder %s28, 1
      %p235 = scmp.ne.s32.totalorder %s230, %s232
      %p236 = scmp.eq.s32.totalorder %s28, 0
      %p237 = por %p235, %p236
      %p238 = scmp.ne.s32.totalorder %s230, %s232
      %p239 = scmp.eq.s32.totalorder %s33, 1
      %p240 = por %p238, %p239
      %p241 = scmp.ne.s32.totalorder %s232, %s233
      %p242 = scmp.eq.s32.totalorder %s33, 0
      %p243 = por %p241, %p242
      %p244 = scmp.ne.s32.totalorder %s232, %s233
      %p245 = scmp.eq.s32.totalorder %s34, 1
      %p246 = por %p244, %p245
      %p248 = scmp.ne.s32.totalorder %s233, %s247
      %p249 = scmp.eq.s32.totalorder %s34, 0
      %p250 = por %p248, %p249
      %s252 = sadd.s32 %s251, 1
      %p255 = scmp.eq.s32.totalorder %s28, 1
      %p256 = scmp.ne.s32.totalorder %s251, %s253
      %p257 = scmp.eq.s32.totalorder %s28, 0
      %p258 = por %p256, %p257
      %p259 = scmp.ne.s32.totalorder %s251, %s253
      %p260 = scmp.eq.s32.totalorder %s33, 1
      %p261 = por %p259, %p260
      %p262 = scmp.ne.s32.totalorder %s253, %s254
      %p263 = scmp.eq.s32.totalorder %s33, 0
      %p264 = por %p262, %p263
      %p265 = scmp.ne.s32.totalorder %s253, %s254
      %p266 = scmp.eq.s32.totalorder %s34, 1
      %p267 = por %p265, %p266
      %p269 = scmp.ne.s32.totalorder %s254, %s268
      %p270 = scmp.eq.s32.totalorder %s34, 0
      %p271 = por %p269, %p270
      %s273 = sadd.s32 %s272, 1
      %p276 = scmp.eq.s32.totalorder %s28, 1
      %p277 = scmp.ne.s32.totalorder %s272, %s274
      %p278 = scmp.eq.s32.totalorder %s28, 0
      %p279 = por %p277, %p278
      %p280 = scmp.ne.s32.totalorder %s272, %s274
      %p281 = scmp.eq.s32.totalorder %s33, 1
      %p282 = por %p280, %p281
      %p283 = scmp.ne.s32.totalorder %s274, %s275
      %p284 = scmp.eq.s32.totalorder %s33, 0
      %p285 = por %p283, %p284
      %p286 = scmp.ne.s32.totalorder %s274, %s275
      %p287 = scmp.eq.s32.totalorder %s34, 1
      %p288 = por %p286, %p287
      %p290 = scmp.ne.s32.totalorder %s275, %s289
      %p291 = scmp.eq.s32.totalorder %s34, 0
      %p292 = por %p290, %p291
      %s294 = sadd.s32 %s293, 1
      %p297 = scmp.eq.s32.totalorder %s28, 1
      %p298 = scmp.ne.s32.totalorder %s293, %s295
      %p299 = scmp.eq.s32.totalorder %s28, 0
      %p300 = por %p298, %p299
      %p301 = scmp.ne.s32.totalorder %s293, %s295
      %p302 = scmp.eq.s32.totalorder %s33, 1
      %p303 = por %p301, %p302
      %p304 = scmp.ne.s32.totalorder %s295, %s296
      %p305 = scmp.eq.s32.totalorder %s33, 0
      %p306 = por %p304, %p305
      %p307 = scmp.ne.s32.totalorder %s295, %s296
      %p308 = scmp.eq.s32.totalorder %s34, 1
      %p309 = por %p307, %p308
      %p311 = scmp.ne.s32.totalorder %s296, %s310
      %p312 = scmp.eq.s32.totalorder %s34, 0
      %p313 = por %p311, %p312
      %s315 = sadd.s32 %s314, 1
      %p318 = scmp.eq.s32.totalorder %s28, 1
      %p319 = scmp.ne.s32.totalorder %s314, %s316
      %p320 = scmp.eq.s32.totalorder %s28, 0
      %p321 = por %p319, %p320
      %p322 = scmp.ne.s32.totalorder %s314, %s316
      %p323 = scmp.eq.s32.totalorder %s33, 1
      %p324 = por %p322, %p323
      %p325 = scmp.ne.s32.totalorder %s316, %s317
      %p326 = scmp.eq.s32.totalorder %s33, 0
      %p327 = por %p325, %p326
      %p328 = scmp.ne.s32.totalorder %s316, %s317
      %p329 = scmp.eq.s32.totalorder %s34, 1
      %p330 = por %p328, %p329
      %p332 = scmp.ne.s32.totalorder %s317, %s331
      %p333 = scmp.eq.s32.totalorder %s34, 0
      %p334 = por %p332, %p333
      %s335 = ssub.s32 %s28, %s35
      %p336 = scmp.eq.s32.totalorder %s335, 0
      %s338 = sadd.s32 %s337, 1
      %s339 = scalar_select %p336, %s337, %s338
      %p342 = pneg %p336
      %p343 = scmp.eq.s32.totalorder %s28, 1
      %p344 = por %p342, %p343
      %p345 = scmp.ne.s32.totalorder %s337, %s340
      %p346 = scmp.eq.s32.totalorder %s28, 0
      %p347 = por %p345, %p346
      %p348 = scmp.ne.s32.totalorder %s337, %s340
      %p349 = scmp.eq.s32.totalorder %s33, 1
      %p350 = por %p348, %p349
      %p351 = scmp.ne.s32.totalorder %s340, %s341
      %p352 = scmp.eq.s32.totalorder %s33, 0
      %p353 = por %p351, %p352
      %p354 = scmp.ne.s32.totalorder %s340, %s341
      %p355 = scmp.eq.s32.totalorder %s34, 1
      %p356 = por %p354, %p355
      %p358 = scmp.ne.s32.totalorder %s341, %s357
      %p359 = scmp.eq.s32.totalorder %s34, 0
      %p360 = por %p358, %p359
      %p361 = scmp.le.s32.totalorder 1, %s28
      %p362 = scmp.lt.s32.totalorder %s28, 3
      %p363 = pnand %p361, %p362
      %p364 = pneg %p363
      // Predicated region
      $region9: #{tpu_custom_call.1} parent=5 // pred_check
        _
      $region10: #{tpu_custom_call.1} parent=5 // pred_check_branch
        %366 = sbr.rel (%p363) target = $region12
      $region11: #{tpu_custom_call.1} parent=5 // pred_region
        %s367 = ssub.s32 %s28, 1
        // Predicated region
        $region13: #{tpu_custom_call.1} parent=11 // pred_check
          %p368 = pneg %p75
        $region14: #{tpu_custom_call.1} parent=11 // pred_check_branch
          %370 = sbr.rel (%p368) target = $region16
        $region15: #{tpu_custom_call.1} parent=11 // pred_region
          _
        $region16: #{tpu_custom_call.1} parent=11 // pred_fallthru
          _
        // Predicated region
        $region17: #{tpu_custom_call.1} parent=11 // pred_check
          %p371 = pneg %p96
        $region18: #{tpu_custom_call.1} parent=11 // pred_check_branch
          %373 = sbr.rel (%p371) target = $region20
        $region19: #{tpu_custom_call.1} parent=11 // pred_region
          _
        $region20: #{tpu_custom_call.1} parent=11 // pred_fallthru
          _
        // Predicated region
        $region21: #{tpu_custom_call.1} parent=11 // pred_check
          %p374 = pneg %p117
        $region22: #{tpu_custom_call.1} parent=11 // pred_check_branch
          %376 = sbr.rel (%p374) target = $region24
        $region23: #{tpu_custom_call.1} parent=11 // pred_region
          %378 = vsyncadd [#allocation6], 0
          %s379 = sshll.u32 %s3, 4
          %s380 = int_to_ptr.hbm [resolvable:$true] %s379
          %s381 = sshll.u32 [#allocation5], 4
          %s382 = int_to_ptr.vmem [resolvable:$true] %s381
          %387 = dma.hbm_to_vmem [thread:$0]  %s380, 12288, %s382, [#allocation6], 128, 128, 8
        $region24: #{tpu_custom_call.1} parent=11 // pred_fallthru
          _
        // Predicated region
        $region25: #{tpu_custom_call.1} parent=11 // pred_check
          %p388 = pneg %p138
        $region26: #{tpu_custom_call.1} parent=11 // pred_check_branch
          %390 = sbr.rel (%p388) target = $region28
        $region27: #{tpu_custom_call.1} parent=11 // pred_region
          %392 = vsyncadd [#allocation6], 0
          %s393 = sshll.u32 %s4, 4
          %s394 = int_to_ptr.hbm [resolvable:$true] %s393
          %s395 = sshll.u32 [#allocation7], 4
          %s396 = int_to_ptr.vmem [resolvable:$true] %s395
          %401 = dma.hbm_to_vmem [thread:$0]  %s394, 4096, %s396, [#allocation6], 256, 256, 16
        $region28: #{tpu_custom_call.1} parent=11 // pred_fallthru
          _
        // Predicated region
        $region29: #{tpu_custom_call.1} parent=11 // pred_check
          %p402 = pneg %p159
        $region30: #{tpu_custom_call.1} parent=11 // pred_check_branch
          %404 = sbr.rel (%p402) target = $region32
        $region31: #{tpu_custom_call.1} parent=11 // pred_region
          _
        $region32: #{tpu_custom_call.1} parent=11 // pred_fallthru
          _
        // Predicated region
        $region33: #{tpu_custom_call.1} parent=11 // pred_check
          %p405 = pneg %p180
        $region34: #{tpu_custom_call.1} parent=11 // pred_check_branch
          %407 = sbr.rel (%p405) target = $region36
        $region35: #{tpu_custom_call.1} parent=11 // pred_region
          _
        $region36: #{tpu_custom_call.1} parent=11 // pred_fallthru
          _
        // Predicated region
        $region37: #{tpu_custom_call.1} parent=11 // pred_check
          %p408 = pneg %p201
        $region38: #{tpu_custom_call.1} parent=11 // pred_check_branch
          %410 = sbr.rel (%p408) target = $region40
        $region39: #{tpu_custom_call.1} parent=11 // pred_region
          _
        $region40: #{tpu_custom_call.1} parent=11 // pred_fallthru
          _
        // Predicated region
        $region41: #{tpu_custom_call.1} parent=11 // pred_check
          %p411 = pneg %p222
        $region42: #{tpu_custom_call.1} parent=11 // pred_check_branch
          %413 = sbr.rel (%p411) target = $region44
        $region43: #{tpu_custom_call.1} parent=11 // pred_region
          %415 = vsyncadd [#allocation9], 0
          %s416 = sshll.u32 %s8, 4
          %s417 = int_to_ptr.hbm [resolvable:$true] %s416
          %s418 = sshll.u32 [#allocation8], 4
          %s419 = int_to_ptr.vmem [resolvable:$true] %s418
          %424 = dma.hbm_to_vmem [thread:$0]  %s417, 2048, %s419, [#allocation9], 128, 128, 8
        $region44: #{tpu_custom_call.1} parent=11 // pred_fallthru
          _
        // Predicated region
        $region45: #{tpu_custom_call.1} parent=11 // pred_check
          %p425 = pneg %p243
        $region46: #{tpu_custom_call.1} parent=11 // pred_check_branch
          %427 = sbr.rel (%p425) target = $region48
        $region47: #{tpu_custom_call.1} parent=11 // pred_region
          _
        $region48: #{tpu_custom_call.1} parent=11 // pred_fallthru
          _
        // Predicated region
        $region49: #{tpu_custom_call.1} parent=11 // pred_check
          %p428 = pneg %p264
        $region50: #{tpu_custom_call.1} parent=11 // pred_check_branch
          %430 = sbr.rel (%p428) target = $region52
        $region51: #{tpu_custom_call.1} parent=11 // pred_region
          %432 = vsyncadd [#allocation9], 0
          %s433 = sshll.u32 %s10, 4
          %s434 = int_to_ptr.hbm [resolvable:$true] %s433
          %s435 = sshll.u32 [#allocation10], 4
          %s436 = int_to_ptr.vmem [resolvable:$true] %s435
          %441 = dma.hbm_to_vmem [thread:$0]  %s434, 2048, %s436, [#allocation9], 128, 128, 8
        $region52: #{tpu_custom_call.1} parent=11 // pred_fallthru
          _
        // Predicated region
        $region53: #{tpu_custom_call.1} parent=11 // pred_check
          %p442 = pneg %p285
        $region54: #{tpu_custom_call.1} parent=11 // pred_check_branch
          %444 = sbr.rel (%p442) target = $region56
        $region55: #{tpu_custom_call.1} parent=11 // pred_region
          _
        $region56: #{tpu_custom_call.1} parent=11 // pred_fallthru
          _
        // Predicated region
        $region57: #{tpu_custom_call.1} parent=11 // pred_check
          %p445 = pneg %p306
        $region58: #{tpu_custom_call.1} parent=11 // pred_check_branch
          %447 = sbr.rel (%p445) target = $region60
        $region59: #{tpu_custom_call.1} parent=11 // pred_region
          _
        $region60: #{tpu_custom_call.1} parent=11 // pred_fallthru
          _
        // Predicated region
        $region61: #{tpu_custom_call.1} parent=11 // pred_check
          %p448 = pneg %p327
        $region62: #{tpu_custom_call.1} parent=11 // pred_check_branch
          %450 = sbr.rel (%p448) target = $region64
        $region63: #{tpu_custom_call.1} parent=11 // pred_region
          _
        $region64: #{tpu_custom_call.1} parent=11 // pred_fallthru
          _
      $region12: #{tpu_custom_call.1} parent=5 // pred_fallthru
        _
      %p451 = scmp.lt.s32.totalorder %s28, 2
      // Predicated region
      $region65: #{tpu_custom_call.1} parent=5 // pred_check
        %p452 = pneg %p451
      $region66: #{tpu_custom_call.1} parent=5 // pred_check_branch
        %454 = sbr.rel (%p452) target = $region68
      $region67: #{tpu_custom_call.1} parent=5 // pred_region
        // Predicated region
        $region69: #{tpu_custom_call.1} parent=67 // pred_check
          %p455 = pneg %p48
        $region70: #{tpu_custom_call.1} parent=67 // pred_check_branch
          %457 = sbr.rel (%p455) target = $region72
        $region71: #{tpu_custom_call.1} parent=67 // pred_region
          %s458 = sand.u32 %s38, 1
          %s459 = scalar_lea.sflag [#allocation3], %s458
          %s460 = sand.u32 %s38, 1
          %s461 = smul.addr %s460, 8
          %s462 = scalar_lea.vmem [#allocation2], %s461
          %464 = vsyncadd %s459, 0
          %s465 = smul.addr %s28, 8
          %s466 = scalar_lea.hbm %s0, %s465
          %s468 = sshll.u32 %s466, 4
          %s469 = int_to_ptr.hbm [resolvable:$true] %s468
          %s470 = sshll.u32 %s462, 4
          %s471 = int_to_ptr.vmem [resolvable:$true] %s470
          %473 = dma.hbm_to_vmem [thread:$0]  %s469, 128, %s471, %s459
        $region72: #{tpu_custom_call.1} parent=67 // pred_fallthru
          _
      $region68: #{tpu_custom_call.1} parent=5 // pred_fallthru
        _
      %p474 = scmp.le.s32.totalorder 1, %s28
      %p475 = scmp.lt.s32.totalorder %s28, 3
      %p476 = pnand %p474, %p475
      %p477 = pneg %p476
      // Predicated region
      $region73: #{tpu_custom_call.1} parent=5 // pred_check
        _
      $region74: #{tpu_custom_call.1} parent=5 // pred_check_branch
        %479 = sbr.rel (%p476) target = $region76
      $region75: #{tpu_custom_call.1} parent=5 // pred_region
        %s480 = ssub.s32 %s28, 1
        %s481 = sand.u32 %s41, 1
        %s482 = scalar_lea.sflag [#allocation3], %s481
        %s483 = sand.u32 %s41, 1
        %s484 = smul.addr %s483, 8
        %s485 = scalar_lea.vmem [#allocation2], %s484
        // Predicated region
        $region77: #{tpu_custom_call.1} parent=75 // pred_check
          %p486 = pneg %p54
        $region78: #{tpu_custom_call.1} parent=75 // pred_check_branch
          %488 = sbr.rel (%p486) target = $region80
        $region79: #{tpu_custom_call.1} parent=75 // pred_region
          %490 = dma.done %s482, 128
        $region80: #{tpu_custom_call.1} parent=75 // pred_fallthru
          _
        // Predicated region
        $region81: #{tpu_custom_call.1} parent=75 // pred_check
          %p491 = pneg %p117
        $region82: #{tpu_custom_call.1} parent=75 // pred_check_branch
          %493 = sbr.rel (%p491) target = $region84
        $region83: #{tpu_custom_call.1} parent=75 // pred_region
          %495 = dma.done [#allocation6], 12288
        $region84: #{tpu_custom_call.1} parent=75 // pred_fallthru
          _
        // Predicated region
        $region85: #{tpu_custom_call.1} parent=75 // pred_check
          %p496 = pneg %p138
        $region86: #{tpu_custom_call.1} parent=75 // pred_check_branch
          %498 = sbr.rel (%p496) target = $region88
        $region87: #{tpu_custom_call.1} parent=75 // pred_region
          %500 = dma.done [#allocation6], 4096
        $region88: #{tpu_custom_call.1} parent=75 // pred_fallthru
          _
        // Predicated region
        $region89: #{tpu_custom_call.1} parent=75 // pred_check
          %p501 = pneg %p222
        $region90: #{tpu_custom_call.1} parent=75 // pred_check_branch
          %503 = sbr.rel (%p501) target = $region92
        $region91: #{tpu_custom_call.1} parent=75 // pred_region
          %505 = dma.done [#allocation9], 2048
        $region92: #{tpu_custom_call.1} parent=75 // pred_fallthru
          _
        // Predicated region
        $region93: #{tpu_custom_call.1} parent=75 // pred_check
          %p506 = pneg %p264
        $region94: #{tpu_custom_call.1} parent=75 // pred_check_branch
          %508 = sbr.rel (%p506) target = $region96
        $region95: #{tpu_custom_call.1} parent=75 // pred_region
          %510 = dma.done [#allocation9], 2048
        $region96: #{tpu_custom_call.1} parent=75 // pred_fallthru
          _
        %s511 = sand.u32 %s41, 1
        %s512 = scalar_lea.sflag [#allocation3], %s511
        %s513 = sand.u32 %s41, 1
        %s514 = smul.addr %s513, 8
        %s515 = scalar_lea.vmem [#allocation2], %s514
        %p516 = pneg %p54
        %p517 = pneg %p51
        %p518 = pneg %p75
        %p519 = pneg %p72
        %p520 = pneg %p96
        %p521 = pneg %p93
        %p522 = pneg %p117
        %p523 = pneg %p114
        %p524 = pneg %p138
        %p525 = pneg %p135
        %p526 = pneg %p159
        %p527 = pneg %p156
        %p528 = pneg %p180
        %p529 = pneg %p177
        %p530 = pneg %p201
        %p531 = pneg %p198
        %p532 = pneg %p222
        %p533 = pneg %p219
        %p534 = pneg %p243
        %p535 = pneg %p240
        %p536 = pneg %p264
        %p537 = pneg %p261
        %p538 = pneg %p285
        %p539 = pneg %p282
        %p540 = pneg %p306
        %p541 = pneg %p303
        %p542 = pneg %p327
        %p543 = pneg %p324
        %p544 = pneg %p353
        %p545 = pneg %p350
        %s546 = sand.u32 %s340, 1
        %s547 = scalar_lea.sflag [#allocation4], %s546
        %s548 = sand.u32 %s340, 1
        %s549 = smul.addr %s548, 8
        %s550 = scalar_lea.vmem [#allocation11], %s549
        %v551 = vld [vmem:[%s485] sm:$0xff]
        %v552 = vld [vmem:[#allocation5] sm:$0xff]
        %v553 = vld [vmem:[#allocation5 + $0x8] sm:$0xff]
        %v554 = vld [vmem:[#allocation5 + $0x10] sm:$0xff]
        %v555 = vld [vmem:[#allocation5 + $0x18] sm:$0xff]
        %v556 = vld [vmem:[#allocation5 + $0x20] sm:$0xff]
        %v557 = vld [vmem:[#allocation5 + $0x28] sm:$0xff]
        %v558 = vld [vmem:[#allocation5 + $0x30] sm:$0xff]
        %v559 = vld [vmem:[#allocation5 + $0x38] sm:$0xff]
        %v560 = vld [vmem:[#allocation5 + $0x40] sm:$0xff]
        %v561 = vld [vmem:[#allocation5 + $0x48] sm:$0xff]
        %v562 = vld [vmem:[#allocation5 + $0x50] sm:$0xff]
        %v563 = vld [vmem:[#allocation5 + $0x58] sm:$0xff]
        %v564 = vld [vmem:[#allocation5 + $0x60] sm:$0xff]
        %v565 = vld [vmem:[#allocation5 + $0x68] sm:$0xff]
        %v566 = vld [vmem:[#allocation5 + $0x70] sm:$0xff]
        %v567 = vld [vmem:[#allocation5 + $0x78] sm:$0xff]
        %v568 = vld [vmem:[#allocation5 + $0x80] sm:$0xff]
        %v569 = vld [vmem:[#allocation5 + $0x88] sm:$0xff]
        %v570 = vld [vmem:[#allocation5 + $0x90] sm:$0xff]
        %v571 = vld [vmem:[#allocation5 + $0x98] sm:$0xff]
        %v572 = vld [vmem:[#allocation5 + $0xa0] sm:$0xff]
        %v573 = vld [vmem:[#allocation5 + $0xa8] sm:$0xff]
        %v574 = vld [vmem:[#allocation5 + $0xb0] sm:$0xff]
        %v575 = vld [vmem:[#allocation5 + $0xb8] sm:$0xff]
        %v576 = vld [vmem:[#allocation5 + $0xc0] sm:$0xff]
        %v577 = vld [vmem:[#allocation5 + $0xc8] sm:$0xff]
        %v578 = vld [vmem:[#allocation5 + $0xd0] sm:$0xff]
        %v579 = vld [vmem:[#allocation5 + $0xd8] sm:$0xff]
        %v580 = vld [vmem:[#allocation5 + $0xe0] sm:$0xff]
        %v581 = vld [vmem:[#allocation5 + $0xe8] sm:$0xff]
        %v582 = vld [vmem:[#allocation5 + $0xf0] sm:$0xff]
        %v583 = vld [vmem:[#allocation5 + $0xf8] sm:$0xff]
        %v584 = vld [vmem:[#allocation5 + $0x100] sm:$0xff]
        %v585 = vld [vmem:[#allocation5 + $0x108] sm:$0xff]
        %v586 = vld [vmem:[#allocation5 + $0x110] sm:$0xff]
        %v587 = vld [vmem:[#allocation5 + $0x118] sm:$0xff]
        %v588 = vld [vmem:[#allocation5 + $0x120] sm:$0xff]
        %v589 = vld [vmem:[#allocation5 + $0x128] sm:$0xff]
        %v590 = vld [vmem:[#allocation5 + $0x130] sm:$0xff]
        %v591 = vld [vmem:[#allocation5 + $0x138] sm:$0xff]
        %v592 = vld [vmem:[#allocation5 + $0x140] sm:$0xff]
        %v593 = vld [vmem:[#allocation5 + $0x148] sm:$0xff]
        %v594 = vld [vmem:[#allocation5 + $0x150] sm:$0xff]
        %v595 = vld [vmem:[#allocation5 + $0x158] sm:$0xff]
        %v596 = vld [vmem:[#allocation5 + $0x160] sm:$0xff]
        %v597 = vld [vmem:[#allocation5 + $0x168] sm:$0xff]
        %v598 = vld [vmem:[#allocation5 + $0x170] sm:$0xff]
        %v599 = vld [vmem:[#allocation5 + $0x178] sm:$0xff]
        %v600 = vld [vmem:[#allocation5 + $0x180] sm:$0xff]
        %v601 = vld [vmem:[#allocation5 + $0x188] sm:$0xff]
        %v602 = vld [vmem:[#allocation5 + $0x190] sm:$0xff]
        %v603 = vld [vmem:[#allocation5 + $0x198] sm:$0xff]
        %v604 = vld [vmem:[#allocation5 + $0x1a0] sm:$0xff]
        %v605 = vld [vmem:[#allocation5 + $0x1a8] sm:$0xff]
        %v606 = vld [vmem:[#allocation5 + $0x1b0] sm:$0xff]
        %v607 = vld [vmem:[#allocation5 + $0x1b8] sm:$0xff]
        %v608 = vld [vmem:[#allocation5 + $0x1c0] sm:$0xff]
        %v609 = vld [vmem:[#allocation5 + $0x1c8] sm:$0xff]
        %v610 = vld [vmem:[#allocation5 + $0x1d0] sm:$0xff]
        %v611 = vld [vmem:[#allocation5 + $0x1d8] sm:$0xff]
        %v612 = vld [vmem:[#allocation5 + $0x1e0] sm:$0xff]
        %v613 = vld [vmem:[#allocation5 + $0x1e8] sm:$0xff]
        %v614 = vld [vmem:[#allocation5 + $0x1f0] sm:$0xff]
        %v615 = vld [vmem:[#allocation5 + $0x1f8] sm:$0xff]
        %v616 = vld [vmem:[#allocation5 + $0x200] sm:$0xff]
        %v617 = vld [vmem:[#allocation5 + $0x208] sm:$0xff]
        %v618 = vld [vmem:[#allocation5 + $0x210] sm:$0xff]
        %v619 = vld [vmem:[#allocation5 + $0x218] sm:$0xff]
        %v620 = vld [vmem:[#allocation5 + $0x220] sm:$0xff]
        %v621 = vld [vmem:[#allocation5 + $0x228] sm:$0xff]
        %v622 = vld [vmem:[#allocation5 + $0x230] sm:$0xff]
        %v623 = vld [vmem:[#allocation5 + $0x238] sm:$0xff]
        %v624 = vld [vmem:[#allocation5 + $0x240] sm:$0xff]
        %v625 = vld [vmem:[#allocation5 + $0x248] sm:$0xff]
        %v626 = vld [vmem:[#allocation5 + $0x250] sm:$0xff]
        %v627 = vld [vmem:[#allocation5 + $0x258] sm:$0xff]
        %v628 = vld [vmem:[#allocation5 + $0x260] sm:$0xff]
        %v629 = vld [vmem:[#allocation5 + $0x268] sm:$0xff]
        %v630 = vld [vmem:[#allocation5 + $0x270] sm:$0xff]
        %v631 = vld [vmem:[#allocation5 + $0x278] sm:$0xff]
        %v632 = vld [vmem:[#allocation5 + $0x280] sm:$0xff]
        %v633 = vld [vmem:[#allocation5 + $0x288] sm:$0xff]
        %v634 = vld [vmem:[#allocation5 + $0x290] sm:$0xff]
        %v635 = vld [vmem:[#allocation5 + $0x298] sm:$0xff]
        %v636 = vld [vmem:[#allocation5 + $0x2a0] sm:$0xff]
        %v637 = vld [vmem:[#allocation5 + $0x2a8] sm:$0xff]
        %v638 = vld [vmem:[#allocation5 + $0x2b0] sm:$0xff]
        %v639 = vld [vmem:[#allocation5 + $0x2b8] sm:$0xff]
        %v640 = vld [vmem:[#allocation5 + $0x2c0] sm:$0xff]
        %v641 = vld [vmem:[#allocation5 + $0x2c8] sm:$0xff]
        %v642 = vld [vmem:[#allocation5 + $0x2d0] sm:$0xff]
        %v643 = vld [vmem:[#allocation5 + $0x2d8] sm:$0xff]
        %v644 = vld [vmem:[#allocation5 + $0x2e0] sm:$0xff]
        %v645 = vld [vmem:[#allocation5 + $0x2e8] sm:$0xff]
        %v646 = vld [vmem:[#allocation5 + $0x2f0] sm:$0xff]
        %v647 = vld [vmem:[#allocation5 + $0x2f8] sm:$0xff]
        %648 = vmatpush.xpose.msra.mxu0 0.0
        %649 = vmatpush.xpose.msra.mxu0 0.0
        %650 = vmatpush.xpose.msra.mxu0 0.0
        %651 = vmatpush.xpose.msra.mxu0 0.0
        %652 = vmatpush.xpose.msra.mxu0 0.0
        %653 = vmatpush.xpose.msra.mxu0 0.0
        %654 = vmatpush.xpose.msra.mxu0 0.0
        %655 = vmatpush.xpose.msra.mxu0 0.0
        %656 = vmatpush.xpose.msra.mxu0 0.0
        %657 = vmatpush.xpose.msra.mxu0 0.0
        %658 = vmatpush.xpose.msra.mxu0 0.0
        %659 = vmatpush.xpose.msra.mxu0 0.0
        %660 = vmatpush.xpose.msra.mxu0 0.0
        %661 = vmatpush.xpose.msra.mxu0 0.0
        %662 = vmatpush.xpose.msra.mxu0 0.0
        %663 = vmatpush.xpose.msra.mxu0 %v551
        %664 = vmatmul.f32.gmra.mxu0 %v552
        %v665 = vpop.f32.mrf.mxu0
        %v666 = vadd.f32 0.0, %v665
        %667 = vmatmul.f32.gmra.mxu0 %v553
        %v668 = vpop.f32.mrf.mxu0
        %v669 = vadd.f32 0.0, %v668
        %670 = vmatmul.f32.gmra.mxu0 %v554
        %v671 = vpop.f32.mrf.mxu0
        %v672 = vadd.f32 0.0, %v671
        %673 = vmatmul.f32.gmra.mxu0 %v555
        %v674 = vpop.f32.mrf.mxu0
        %v675 = vadd.f32 0.0, %v674
        %676 = vmatmul.f32.gmra.mxu0 %v556
        %v677 = vpop.f32.mrf.mxu0
        %v678 = vadd.f32 0.0, %v677
        %679 = vmatmul.f32.gmra.mxu0 %v557
        %v680 = vpop.f32.mrf.mxu0
        %v681 = vadd.f32 0.0, %v680
        %682 = vmatmul.f32.gmra.mxu0 %v558
        %v683 = vpop.f32.mrf.mxu0
        %v684 = vadd.f32 0.0, %v683
        %685 = vmatmul.f32.gmra.mxu0 %v559
        %v686 = vpop.f32.mrf.mxu0
        %v687 = vadd.f32 0.0, %v686
        %688 = vmatmul.f32.gmra.mxu0 %v560
        %v689 = vpop.f32.mrf.mxu0
        %v690 = vadd.f32 0.0, %v689
        %691 = vmatmul.f32.gmra.mxu0 %v561
        %v692 = vpop.f32.mrf.mxu0
        %v693 = vadd.f32 0.0, %v692
        %694 = vmatmul.f32.gmra.mxu0 %v562
        %v695 = vpop.f32.mrf.mxu0
        %v696 = vadd.f32 0.0, %v695
        %697 = vmatmul.f32.gmra.mxu0 %v563
        %v698 = vpop.f32.mrf.mxu0
        %v699 = vadd.f32 0.0, %v698
        %700 = vmatmul.f32.gmra.mxu0 %v564
        %v701 = vpop.f32.mrf.mxu0
        %v702 = vadd.f32 0.0, %v701
        %703 = vmatmul.f32.gmra.mxu0 %v565
        %v704 = vpop.f32.mrf.mxu0
        %v705 = vadd.f32 0.0, %v704
        %706 = vmatmul.f32.gmra.mxu0 %v566
        %v707 = vpop.f32.mrf.mxu0
        %v708 = vadd.f32 0.0, %v707
        %709 = vmatmul.f32.gmra.mxu0 %v567
        %v710 = vpop.f32.mrf.mxu0
        %v711 = vadd.f32 0.0, %v710
        %712 = vmatmul.f32.gmra.mxu0 %v568
        %v713 = vpop.f32.mrf.mxu0
        %v714 = vadd.f32 0.0, %v713
        %715 = vmatmul.f32.gmra.mxu0 %v569
        %v716 = vpop.f32.mrf.mxu0
        %v717 = vadd.f32 0.0, %v716
        %718 = vmatmul.f32.gmra.mxu0 %v570
        %v719 = vpop.f32.mrf.mxu0
        %v720 = vadd.f32 0.0, %v719
        %721 = vmatmul.f32.gmra.mxu0 %v571
        %v722 = vpop.f32.mrf.mxu0
        %v723 = vadd.f32 0.0, %v722
        %724 = vmatmul.f32.gmra.mxu0 %v572
        %v725 = vpop.f32.mrf.mxu0
        %v726 = vadd.f32 0.0, %v725
        %727 = vmatmul.f32.gmra.mxu0 %v573
        %v728 = vpop.f32.mrf.mxu0
        %v729 = vadd.f32 0.0, %v728
        %730 = vmatmul.f32.gmra.mxu0 %v574
        %v731 = vpop.f32.mrf.mxu0
        %v732 = vadd.f32 0.0, %v731
        %733 = vmatmul.f32.gmra.mxu0 %v575
        %v734 = vpop.f32.mrf.mxu0
        %v735 = vadd.f32 0.0, %v734
        %736 = vmatmul.f32.gmra.mxu0 %v576
        %v737 = vpop.f32.mrf.mxu0
        %v738 = vadd.f32 0.0, %v737
        %739 = vmatmul.f32.gmra.mxu0 %v577
        %v740 = vpop.f32.mrf.mxu0
        %v741 = vadd.f32 0.0, %v740
        %742 = vmatmul.f32.gmra.mxu0 %v578
        %v743 = vpop.f32.mrf.mxu0
        %v744 = vadd.f32 0.0, %v743
        %745 = vmatmul.f32.gmra.mxu0 %v579
        %v746 = vpop.f32.mrf.mxu0
        %v747 = vadd.f32 0.0, %v746
        %748 = vmatmul.f32.gmra.mxu0 %v580
        %v749 = vpop.f32.mrf.mxu0
        %v750 = vadd.f32 0.0, %v749
        %751 = vmatmul.f32.gmra.mxu0 %v581
        %v752 = vpop.f32.mrf.mxu0
        %v753 = vadd.f32 0.0, %v752
        %754 = vmatmul.f32.gmra.mxu0 %v582
        %v755 = vpop.f32.mrf.mxu0
        %v756 = vadd.f32 0.0, %v755
        %757 = vmatmul.f32.gmra.mxu0 %v583
        %v758 = vpop.f32.mrf.mxu0
        %v759 = vadd.f32 0.0, %v758
        %760 = vmatmul.f32.gmra.mxu0 %v584
        %v761 = vpop.f32.mrf.mxu0
        %v762 = vadd.f32 0.0, %v761
        %763 = vmatmul.f32.gmra.mxu0 %v585
        %v764 = vpop.f32.mrf.mxu0
        %v765 = vadd.f32 0.0, %v764
        %766 = vmatmul.f32.gmra.mxu0 %v586
        %v767 = vpop.f32.mrf.mxu0
        %v768 = vadd.f32 0.0, %v767
        %769 = vmatmul.f32.gmra.mxu0 %v587
        %v770 = vpop.f32.mrf.mxu0
        %v771 = vadd.f32 0.0, %v770
        %772 = vmatmul.f32.gmra.mxu0 %v588
        %v773 = vpop.f32.mrf.mxu0
        %v774 = vadd.f32 0.0, %v773
        %775 = vmatmul.f32.gmra.mxu0 %v589
        %v776 = vpop.f32.mrf.mxu0
        %v777 = vadd.f32 0.0, %v776
        %778 = vmatmul.f32.gmra.mxu0 %v590
        %v779 = vpop.f32.mrf.mxu0
        %v780 = vadd.f32 0.0, %v779
        %781 = vmatmul.f32.gmra.mxu0 %v591
        %v782 = vpop.f32.mrf.mxu0
        %v783 = vadd.f32 0.0, %v782
        %784 = vmatmul.f32.gmra.mxu0 %v592
        %v785 = vpop.f32.mrf.mxu0
        %v786 = vadd.f32 0.0, %v785
        %787 = vmatmul.f32.gmra.mxu0 %v593
        %v788 = vpop.f32.mrf.mxu0
        %v789 = vadd.f32 0.0, %v788
        %790 = vmatmul.f32.gmra.mxu0 %v594
        %v791 = vpop.f32.mrf.mxu0
        %v792 = vadd.f32 0.0, %v791
        %793 = vmatmul.f32.gmra.mxu0 %v595
        %v794 = vpop.f32.mrf.mxu0
        %v795 = vadd.f32 0.0, %v794
        %796 = vmatmul.f32.gmra.mxu0 %v596
        %v797 = vpop.f32.mrf.mxu0
        %v798 = vadd.f32 0.0, %v797
        %799 = vmatmul.f32.gmra.mxu0 %v597
        %v800 = vpop.f32.mrf.mxu0
        %v801 = vadd.f32 0.0, %v800
        %802 = vmatmul.f32.gmra.mxu0 %v598
        %v803 = vpop.f32.mrf.mxu0
        %v804 = vadd.f32 0.0, %v803
        %805 = vmatmul.f32.gmra.mxu0 %v599
        %v806 = vpop.f32.mrf.mxu0
        %v807 = vadd.f32 0.0, %v806
        %808 = vmatmul.f32.gmra.mxu0 %v600
        %v809 = vpop.f32.mrf.mxu0
        %v810 = vadd.f32 0.0, %v809
        %811 = vmatmul.f32.gmra.mxu0 %v601
        %v812 = vpop.f32.mrf.mxu0
        %v813 = vadd.f32 0.0, %v812
        %814 = vmatmul.f32.gmra.mxu0 %v602
        %v815 = vpop.f32.mrf.mxu0
        %v816 = vadd.f32 0.0, %v815
        %817 = vmatmul.f32.gmra.mxu0 %v603
        %v818 = vpop.f32.mrf.mxu0
        %v819 = vadd.f32 0.0, %v818
        %820 = vmatmul.f32.gmra.mxu0 %v604
        %v821 = vpop.f32.mrf.mxu0
        %v822 = vadd.f32 0.0, %v821
        %823 = vmatmul.f32.gmra.mxu0 %v605
        %v824 = vpop.f32.mrf.mxu0
        %v825 = vadd.f32 0.0, %v824
        %826 = vmatmul.f32.gmra.mxu0 %v606
        %v827 = vpop.f32.mrf.mxu0
        %v828 = vadd.f32 0.0, %v827
        %829 = vmatmul.f32.gmra.mxu0 %v607
        %v830 = vpop.f32.mrf.mxu0
        %v831 = vadd.f32 0.0, %v830
        %832 = vmatmul.f32.gmra.mxu0 %v608
        %v833 = vpop.f32.mrf.mxu0
        %v834 = vadd.f32 0.0, %v833
        %835 = vmatmul.f32.gmra.mxu0 %v609
        %v836 = vpop.f32.mrf.mxu0
        %v837 = vadd.f32 0.0, %v836
        %838 = vmatmul.f32.gmra.mxu0 %v610
        %v839 = vpop.f32.mrf.mxu0
        %v840 = vadd.f32 0.0, %v839
        %841 = vmatmul.f32.gmra.mxu0 %v611
        %v842 = vpop.f32.mrf.mxu0
        %v843 = vadd.f32 0.0, %v842
        %844 = vmatmul.f32.gmra.mxu0 %v612
        %v845 = vpop.f32.mrf.mxu0
        %v846 = vadd.f32 0.0, %v845
        %847 = vmatmul.f32.gmra.mxu0 %v613
        %v848 = vpop.f32.mrf.mxu0
        %v849 = vadd.f32 0.0, %v848
        %850 = vmatmul.f32.gmra.mxu0 %v614
        %v851 = vpop.f32.mrf.mxu0
        %v852 = vadd.f32 0.0, %v851
        %853 = vmatmul.f32.gmra.mxu0 %v615
        %v854 = vpop.f32.mrf.mxu0
        %v855 = vadd.f32 0.0, %v854
        %856 = vmatmul.f32.gmra.mxu0 %v616
        %v857 = vpop.f32.mrf.mxu0
        %v858 = vadd.f32 0.0, %v857
        %859 = vmatmul.f32.gmra.mxu0 %v617
        %v860 = vpop.f32.mrf.mxu0
        %v861 = vadd.f32 0.0, %v860
        %862 = vmatmul.f32.gmra.mxu0 %v618
        %v863 = vpop.f32.mrf.mxu0
        %v864 = vadd.f32 0.0, %v863
        %865 = vmatmul.f32.gmra.mxu0 %v619
        %v866 = vpop.f32.mrf.mxu0
        %v867 = vadd.f32 0.0, %v866
        %868 = vmatmul.f32.gmra.mxu0 %v620
        %v869 = vpop.f32.mrf.mxu0
        %v870 = vadd.f32 0.0, %v869
        %871 = vmatmul.f32.gmra.mxu0 %v621
        %v872 = vpop.f32.mrf.mxu0
        %v873 = vadd.f32 0.0, %v872
        %874 = vmatmul.f32.gmra.mxu0 %v622
        %v875 = vpop.f32.mrf.mxu0
        %v876 = vadd.f32 0.0, %v875
        %877 = vmatmul.f32.gmra.mxu0 %v623
        %v878 = vpop.f32.mrf.mxu0
        %v879 = vadd.f32 0.0, %v878
        %880 = vmatmul.f32.gmra.mxu0 %v624
        %v881 = vpop.f32.mrf.mxu0
        %v882 = vadd.f32 0.0, %v881
        %883 = vmatmul.f32.gmra.mxu0 %v625
        %v884 = vpop.f32.mrf.mxu0
        %v885 = vadd.f32 0.0, %v884
        %886 = vmatmul.f32.gmra.mxu0 %v626
        %v887 = vpop.f32.mrf.mxu0
        %v888 = vadd.f32 0.0, %v887
        %889 = vmatmul.f32.gmra.mxu0 %v627
        %v890 = vpop.f32.mrf.mxu0
        %v891 = vadd.f32 0.0, %v890
        %892 = vmatmul.f32.gmra.mxu0 %v628
        %v893 = vpop.f32.mrf.mxu0
        %v894 = vadd.f32 0.0, %v893
        %895 = vmatmul.f32.gmra.mxu0 %v629
        %v896 = vpop.f32.mrf.mxu0
        %v897 = vadd.f32 0.0, %v896
        %898 = vmatmul.f32.gmra.mxu0 %v630
        %v899 = vpop.f32.mrf.mxu0
        %v900 = vadd.f32 0.0, %v899
        %901 = vmatmul.f32.gmra.mxu0 %v631
        %v902 = vpop.f32.mrf.mxu0
        %v903 = vadd.f32 0.0, %v902
        %904 = vmatmul.f32.gmra.mxu0 %v632
        %v905 = vpop.f32.mrf.mxu0
        %v906 = vadd.f32 0.0, %v905
        %907 = vmatmul.f32.gmra.mxu0 %v633
        %v908 = vpop.f32.mrf.mxu0
        %v909 = vadd.f32 0.0, %v908
        %910 = vmatmul.f32.gmra.mxu0 %v634
        %v911 = vpop.f32.mrf.mxu0
        %v912 = vadd.f32 0.0, %v911
        %913 = vmatmul.f32.gmra.mxu0 %v635
        %v914 = vpop.f32.mrf.mxu0
        %v915 = vadd.f32 0.0, %v914
        %916 = vmatmul.f32.gmra.mxu0 %v636
        %v917 = vpop.f32.mrf.mxu0
        %v918 = vadd.f32 0.0, %v917
        %919 = vmatmul.f32.gmra.mxu0 %v637
        %v920 = vpop.f32.mrf.mxu0
        %v921 = vadd.f32 0.0, %v920
        %922 = vmatmul.f32.gmra.mxu0 %v638
        %v923 = vpop.f32.mrf.mxu0
        %v924 = vadd.f32 0.0, %v923
        %925 = vmatmul.f32.gmra.mxu0 %v639
        %v926 = vpop.f32.mrf.mxu0
        %v927 = vadd.f32 0.0, %v926
        %928 = vmatmul.f32.gmra.mxu0 %v640
        %v929 = vpop.f32.mrf.mxu0
        %v930 = vadd.f32 0.0, %v929
        %931 = vmatmul.f32.gmra.mxu0 %v641
        %v932 = vpop.f32.mrf.mxu0
        %v933 = vadd.f32 0.0, %v932
        %934 = vmatmul.f32.gmra.mxu0 %v642
        %v935 = vpop.f32.mrf.mxu0
        %v936 = vadd.f32 0.0, %v935
        %937 = vmatmul.f32.gmra.mxu0 %v643
        %v938 = vpop.f32.mrf.mxu0
        %v939 = vadd.f32 0.0, %v938
        %940 = vmatmul.f32.gmra.mxu0 %v644
        %v941 = vpop.f32.mrf.mxu0
        %v942 = vadd.f32 0.0, %v941
        %943 = vmatmul.f32.gmra.mxu0 %v645
        %v944 = vpop.f32.mrf.mxu0
        %v945 = vadd.f32 0.0, %v944
        %946 = vmatmul.f32.gmra.mxu0 %v646
        %v947 = vpop.f32.mrf.mxu0
        %v948 = vadd.f32 0.0, %v947
        %949 = vmatmul.f32.gmra.mxu0 %v647
        %v950 = vpop.f32.mrf.mxu0
        %v951 = vadd.f32 0.0, %v950
        %952 = vdwg.mxu0
        %953 = vxpose.xlu0.b32.start [1/16] %v666, 128
        %954 = vxpose.xlu0.b32.cont [2/16] %v669, 128
        %955 = vxpose.xlu0.b32.cont [3/16] %v672, 128
        %956 = vxpose.xlu0.b32.cont [4/16] %v675, 128
        %957 = vxpose.xlu0.b32.cont [5/16] 0.0, 128
        %958 = vxpose.xlu0.b32.cont [6/16] 0.0, 128
        %959 = vxpose.xlu0.b32.cont [7/16] 0.0, 128
        %960 = vxpose.xlu0.b32.cont [8/16] 0.0, 128
        %961 = vxpose.xlu0.b32.cont [9/16] 0.0, 128
        %962 = vxpose.xlu0.b32.cont [10/16] 0.0, 128
        %963 = vxpose.xlu0.b32.cont [11/16] 0.0, 128
        %964 = vxpose.xlu0.b32.cont [12/16] 0.0, 128
        %965 = vxpose.xlu0.b32.cont [13/16] 0.0, 128
        %966 = vxpose.xlu0.b32.cont [14/16] 0.0, 128
        %967 = vxpose.xlu0.b32.cont [15/16] 0.0, 128
        %968 = vxpose.xlu0.b32.end [16/16] 0.0, 128
        %v969 = vpop.trf.xlu0
        %v970 = vpop.trf.xlu0
        %v971 = vpop.trf.xlu0
        %v972 = vpop.trf.xlu0
        %v973 = vpop.trf.xlu0
        %v974 = vpop.trf.xlu0
        %v975 = vpop.trf.xlu0
        %v976 = vpop.trf.xlu0
        %v977 = vpop.trf.xlu0
        %v978 = vpop.trf.xlu0
        %v979 = vpop.trf.xlu0
        %v980 = vpop.trf.xlu0
        %v981 = vpop.trf.xlu0
        %v982 = vpop.trf.xlu0
        %v983 = vpop.trf.xlu0
        %v984 = vpop.trf.xlu0
        %vm985 = vcmask 261120
        %v987 = vsel %vm985, %v969, 0
        %989 = vmatpush.msra.mxu0 0.0
        %990 = vmatpush.msra.mxu0 0.0
        %991 = vmatpush.msra.mxu0 0.0
        %992 = vmatpush.msra.mxu0 0.0
        %993 = vmatpush.msra.mxu0 0.0
        %994 = vmatpush.msra.mxu0 0.0
        %995 = vmatpush.msra.mxu0 0.0
        %996 = vmatpush.msra.mxu0 0.0
        %997 = vmatpush.msra.mxu0 0.0
        %998 = vmatpush.msra.mxu0 0.0
        %999 = vmatpush.msra.mxu0 0.0
        %1000 = vmatpush.msra.mxu0 0.0
        %1001 = vmatpush.msra.mxu0 %v771
        %1002 = vmatpush.msra.mxu0 %v768
        %1003 = vmatpush.msra.mxu0 %v765
        %1004 = vmatpush.msra.mxu0 %v762
        %1005 = vmatmul.f32.gmra.mxu0 %v987
        %v1006 = vpop.f32.mrf.mxu0
        %v1007 = vadd.f32 0.0, %v1006
        %1008 = vdwg.mxu0
        %1009 = vxpose.xlu0.b32.start [1/16] %v678, 128
        %1010 = vxpose.xlu0.b32.cont [2/16] %v681, 128
        %1011 = vxpose.xlu0.b32.cont [3/16] %v684, 128
        %1012 = vxpose.xlu0.b32.cont [4/16] %v687, 128
        %1013 = vxpose.xlu0.b32.cont [5/16] 0.0, 128
        %1014 = vxpose.xlu0.b32.cont [6/16] 0.0, 128
        %1015 = vxpose.xlu0.b32.cont [7/16] 0.0, 128
        %1016 = vxpose.xlu0.b32.cont [8/16] 0.0, 128
        %1017 = vxpose.xlu0.b32.cont [9/16] 0.0, 128
        %1018 = vxpose.xlu0.b32.cont [10/16] 0.0, 128
        %1019 = vxpose.xlu0.b32.cont [11/16] 0.0, 128
        %1020 = vxpose.xlu0.b32.cont [12/16] 0.0, 128
        %1021 = vxpose.xlu0.b32.cont [13/16] 0.0, 128
        %1022 = vxpose.xlu0.b32.cont [14/16] 0.0, 128
        %1023 = vxpose.xlu0.b32.cont [15/16] 0.0, 128
        %1024 = vxpose.xlu0.b32.end [16/16] 0.0, 128
        %v1025 = vpop.trf.xlu0
        %v1026 = vpop.trf.xlu0
        %v1027 = vpop.trf.xlu0
        %v1028 = vpop.trf.xlu0
        %v1029 = vpop.trf.xlu0
        %v1030 = vpop.trf.xlu0
        %v1031 = vpop.trf.xlu0
        %v1032 = vpop.trf.xlu0
        %v1033 = vpop.trf.xlu0
        %v1034 = vpop.trf.xlu0
        %v1035 = vpop.trf.xlu0
        %v1036 = vpop.trf.xlu0
        %v1037 = vpop.trf.xlu0
        %v1038 = vpop.trf.xlu0
        %v1039 = vpop.trf.xlu0
        %v1040 = vpop.trf.xlu0
        %v1042 = vsel %vm985, %v1025, 0
        %1044 = vmatpush.msra.mxu0 0.0
        %1045 = vmatpush.msra.mxu0 0.0
        %1046 = vmatpush.msra.mxu0 0.0
        %1047 = vmatpush.msra.mxu0 0.0
        %1048 = vmatpush.msra.mxu0 0.0
        %1049 = vmatpush.msra.mxu0 0.0
        %1050 = vmatpush.msra.mxu0 0.0
        %1051 = vmatpush.msra.mxu0 0.0
        %1052 = vmatpush.msra.mxu0 0.0
        %1053 = vmatpush.msra.mxu0 0.0
        %1054 = vmatpush.msra.mxu0 0.0
        %1055 = vmatpush.msra.mxu0 0.0
        %1056 = vmatpush.msra.mxu0 %v783
        %1057 = vmatpush.msra.mxu0 %v780
        %1058 = vmatpush.msra.mxu0 %v777
        %1059 = vmatpush.msra.mxu0 %v774
        %1060 = vmatmul.f32.gmra.mxu0 %v1042
        %v1061 = vpop.f32.mrf.mxu0
        %v1062 = vadd.f32 0.0, %v1061
        %1063 = vdwg.mxu0
        %1064 = vxpose.xlu0.b32.start [1/16] %v690, 128
        %1065 = vxpose.xlu0.b32.cont [2/16] %v693, 128
        %1066 = vxpose.xlu0.b32.cont [3/16] %v696, 128
        %1067 = vxpose.xlu0.b32.cont [4/16] %v699, 128
        %1068 = vxpose.xlu0.b32.cont [5/16] 0.0, 128
        %1069 = vxpose.xlu0.b32.cont [6/16] 0.0, 128
        %1070 = vxpose.xlu0.b32.cont [7/16] 0.0, 128
        %1071 = vxpose.xlu0.b32.cont [8/16] 0.0, 128
        %1072 = vxpose.xlu0.b32.cont [9/16] 0.0, 128
        %1073 = vxpose.xlu0.b32.cont [10/16] 0.0, 128
        %1074 = vxpose.xlu0.b32.cont [11/16] 0.0, 128
        %1075 = vxpose.xlu0.b32.cont [12/16] 0.0, 128
        %1076 = vxpose.xlu0.b32.cont [13/16] 0.0, 128
        %1077 = vxpose.xlu0.b32.cont [14/16] 0.0, 128
        %1078 = vxpose.xlu0.b32.cont [15/16] 0.0, 128
        %1079 = vxpose.xlu0.b32.end [16/16] 0.0, 128
        %v1080 = vpop.trf.xlu0
        %v1081 = vpop.trf.xlu0
        %v1082 = vpop.trf.xlu0
        %v1083 = vpop.trf.xlu0
        %v1084 = vpop.trf.xlu0
        %v1085 = vpop.trf.xlu0
        %v1086 = vpop.trf.xlu0
        %v1087 = vpop.trf.xlu0
        %v1088 = vpop.trf.xlu0
        %v1089 = vpop.trf.xlu0
        %v1090 = vpop.trf.xlu0
        %v1091 = vpop.trf.xlu0
        %v1092 = vpop.trf.xlu0
        %v1093 = vpop.trf.xlu0
        %v1094 = vpop.trf.xlu0
        %v1095 = vpop.trf.xlu0
        %v1097 = vsel %vm985, %v1080, 0
        %1099 = vmatpush.msra.mxu0 0.0
        %1100 = vmatpush.msra.mxu0 0.0
        %1101 = vmatpush.msra.mxu0 0.0
        %1102 = vmatpush.msra.mxu0 0.0
        %1103 = vmatpush.msra.mxu0 0.0
        %1104 = vmatpush.msra.mxu0 0.0
        %1105 = vmatpush.msra.mxu0 0.0
        %1106 = vmatpush.msra.mxu0 0.0
        %1107 = vmatpush.msra.mxu0 0.0
        %1108 = vmatpush.msra.mxu0 0.0
        %1109 = vmatpush.msra.mxu0 0.0
        %1110 = vmatpush.msra.mxu0 0.0
        %1111 = vmatpush.msra.mxu0 %v795
        %1112 = vmatpush.msra.mxu0 %v792
        %1113 = vmatpush.msra.mxu0 %v789
        %1114 = vmatpush.msra.mxu0 %v786
        %1115 = vmatmul.f32.gmra.mxu0 %v1097
        %v1116 = vpop.f32.mrf.mxu0
        %v1117 = vadd.f32 0.0, %v1116
        %1118 = vdwg.mxu0
        %1119 = vxpose.xlu0.b32.start [1/16] %v702, 128
        %1120 = vxpose.xlu0.b32.cont [2/16] %v705, 128
        %1121 = vxpose.xlu0.b32.cont [3/16] %v708, 128
        %1122 = vxpose.xlu0.b32.cont [4/16] %v711, 128
        %1123 = vxpose.xlu0.b32.cont [5/16] 0.0, 128
        %1124 = vxpose.xlu0.b32.cont [6/16] 0.0, 128
        %1125 = vxpose.xlu0.b32.cont [7/16] 0.0, 128
        %1126 = vxpose.xlu0.b32.cont [8/16] 0.0, 128
        %1127 = vxpose.xlu0.b32.cont [9/16] 0.0, 128
        %1128 = vxpose.xlu0.b32.cont [10/16] 0.0, 128
        %1129 = vxpose.xlu0.b32.cont [11/16] 0.0, 128
        %1130 = vxpose.xlu0.b32.cont [12/16] 0.0, 128
        %1131 = vxpose.xlu0.b32.cont [13/16] 0.0, 128
        %1132 = vxpose.xlu0.b32.cont [14/16] 0.0, 128
        %1133 = vxpose.xlu0.b32.cont [15/16] 0.0, 128
        %1134 = vxpose.xlu0.b32.end [16/16] 0.0, 128
        %v1135 = vpop.trf.xlu0
        %v1136 = vpop.trf.xlu0
        %v1137 = vpop.trf.xlu0
        %v1138 = vpop.trf.xlu0
        %v1139 = vpop.trf.xlu0
        %v1140 = vpop.trf.xlu0
        %v1141 = vpop.trf.xlu0
        %v1142 = vpop.trf.xlu0
        %v1143 = vpop.trf.xlu0
        %v1144 = vpop.trf.xlu0
        %v1145 = vpop.trf.xlu0
        %v1146 = vpop.trf.xlu0
        %v1147 = vpop.trf.xlu0
        %v1148 = vpop.trf.xlu0
        %v1149 = vpop.trf.xlu0
        %v1150 = vpop.trf.xlu0
        %v1152 = vsel %vm985, %v1135, 0
        %1154 = vmatpush.msra.mxu0 0.0
        %1155 = vmatpush.msra.mxu0 0.0
        %1156 = vmatpush.msra.mxu0 0.0
        %1157 = vmatpush.msra.mxu0 0.0
        %1158 = vmatpush.msra.mxu0 0.0
        %1159 = vmatpush.msra.mxu0 0.0
        %1160 = vmatpush.msra.mxu0 0.0
        %1161 = vmatpush.msra.mxu0 0.0
        %1162 = vmatpush.msra.mxu0 0.0
        %1163 = vmatpush.msra.mxu0 0.0
        %1164 = vmatpush.msra.mxu0 0.0
        %1165 = vmatpush.msra.mxu0 0.0
        %1166 = vmatpush.msra.mxu0 %v807
        %1167 = vmatpush.msra.mxu0 %v804
        %1168 = vmatpush.msra.mxu0 %v801
        %1169 = vmatpush.msra.mxu0 %v798
        %1170 = vmatmul.f32.gmra.mxu0 %v1152
        %v1171 = vpop.f32.mrf.mxu0
        %v1172 = vadd.f32 0.0, %v1171
        %1173 = vdwg.mxu0
        %1174 = vxpose.xlu0.b32.start [1/16] %v714, 128
        %1175 = vxpose.xlu0.b32.cont [2/16] %v717, 128
        %1176 = vxpose.xlu0.b32.cont [3/16] %v720, 128
        %1177 = vxpose.xlu0.b32.cont [4/16] %v723, 128
        %1178 = vxpose.xlu0.b32.cont [5/16] 0.0, 128
        %1179 = vxpose.xlu0.b32.cont [6/16] 0.0, 128
        %1180 = vxpose.xlu0.b32.cont [7/16] 0.0, 128
        %1181 = vxpose.xlu0.b32.cont [8/16] 0.0, 128
        %1182 = vxpose.xlu0.b32.cont [9/16] 0.0, 128
        %1183 = vxpose.xlu0.b32.cont [10/16] 0.0, 128
        %1184 = vxpose.xlu0.b32.cont [11/16] 0.0, 128
        %1185 = vxpose.xlu0.b32.cont [12/16] 0.0, 128
        %1186 = vxpose.xlu0.b32.cont [13/16] 0.0, 128
        %1187 = vxpose.xlu0.b32.cont [14/16] 0.0, 128
        %1188 = vxpose.xlu0.b32.cont [15/16] 0.0, 128
        %1189 = vxpose.xlu0.b32.end [16/16] 0.0, 128
        %v1190 = vpop.trf.xlu0
        %v1191 = vpop.trf.xlu0
        %v1192 = vpop.trf.xlu0
        %v1193 = vpop.trf.xlu0
        %v1194 = vpop.trf.xlu0
        %v1195 = vpop.trf.xlu0
        %v1196 = vpop.trf.xlu0
        %v1197 = vpop.trf.xlu0
        %v1198 = vpop.trf.xlu0
        %v1199 = vpop.trf.xlu0
        %v1200 = vpop.trf.xlu0
        %v1201 = vpop.trf.xlu0
        %v1202 = vpop.trf.xlu0
        %v1203 = vpop.trf.xlu0
        %v1204 = vpop.trf.xlu0
        %v1205 = vpop.trf.xlu0
        %v1207 = vsel %vm985, %v1190, 0
        %1209 = vmatpush.msra.mxu0 0.0
        %1210 = vmatpush.msra.mxu0 0.0
        %1211 = vmatpush.msra.mxu0 0.0
        %1212 = vmatpush.msra.mxu0 0.0
        %1213 = vmatpush.msra.mxu0 0.0
        %1214 = vmatpush.msra.mxu0 0.0
        %1215 = vmatpush.msra.mxu0 0.0
        %1216 = vmatpush.msra.mxu0 0.0
        %1217 = vmatpush.msra.mxu0 0.0
        %1218 = vmatpush.msra.mxu0 0.0
        %1219 = vmatpush.msra.mxu0 0.0
        %1220 = vmatpush.msra.mxu0 0.0
        %1221 = vmatpush.msra.mxu0 %v819
        %1222 = vmatpush.msra.mxu0 %v816
        %1223 = vmatpush.msra.mxu0 %v813
        %1224 = vmatpush.msra.mxu0 %v810
        %1225 = vmatmul.f32.gmra.mxu0 %v1207
        %v1226 = vpop.f32.mrf.mxu0
        %v1227 = vadd.f32 0.0, %v1226
        %1228 = vdwg.mxu0
        %1229 = vxpose.xlu0.b32.start [1/16] %v726, 128
        %1230 = vxpose.xlu0.b32.cont [2/16] %v729, 128
        %1231 = vxpose.xlu0.b32.cont [3/16] %v732, 128
        %1232 = vxpose.xlu0.b32.cont [4/16] %v735, 128
        %1233 = vxpose.xlu0.b32.cont [5/16] 0.0, 128
        %1234 = vxpose.xlu0.b32.cont [6/16] 0.0, 128
        %1235 = vxpose.xlu0.b32.cont [7/16] 0.0, 128
        %1236 = vxpose.xlu0.b32.cont [8/16] 0.0, 128
        %1237 = vxpose.xlu0.b32.cont [9/16] 0.0, 128
        %1238 = vxpose.xlu0.b32.cont [10/16] 0.0, 128
        %1239 = vxpose.xlu0.b32.cont [11/16] 0.0, 128
        %1240 = vxpose.xlu0.b32.cont [12/16] 0.0, 128
        %1241 = vxpose.xlu0.b32.cont [13/16] 0.0, 128
        %1242 = vxpose.xlu0.b32.cont [14/16] 0.0, 128
        %1243 = vxpose.xlu0.b32.cont [15/16] 0.0, 128
        %1244 = vxpose.xlu0.b32.end [16/16] 0.0, 128
        %v1245 = vpop.trf.xlu0
        %v1246 = vpop.trf.xlu0
        %v1247 = vpop.trf.xlu0
        %v1248 = vpop.trf.xlu0
        %v1249 = vpop.trf.xlu0
        %v1250 = vpop.trf.xlu0
        %v1251 = vpop.trf.xlu0
        %v1252 = vpop.trf.xlu0
        %v1253 = vpop.trf.xlu0
        %v1254 = vpop.trf.xlu0
        %v1255 = vpop.trf.xlu0
        %v1256 = vpop.trf.xlu0
        %v1257 = vpop.trf.xlu0
        %v1258 = vpop.trf.xlu0
        %v1259 = vpop.trf.xlu0
        %v1260 = vpop.trf.xlu0
        %v1262 = vsel %vm985, %v1245, 0
        %1264 = vmatpush.msra.mxu0 0.0
        %1265 = vmatpush.msra.mxu0 0.0
        %1266 = vmatpush.msra.mxu0 0.0
        %1267 = vmatpush.msra.mxu0 0.0
        %1268 = vmatpush.msra.mxu0 0.0
        %1269 = vmatpush.msra.mxu0 0.0
        %1270 = vmatpush.msra.mxu0 0.0
        %1271 = vmatpush.msra.mxu0 0.0
        %1272 = vmatpush.msra.mxu0 0.0
        %1273 = vmatpush.msra.mxu0 0.0
        %1274 = vmatpush.msra.mxu0 0.0
        %1275 = vmatpush.msra.mxu0 0.0
        %1276 = vmatpush.msra.mxu0 %v831
        %1277 = vmatpush.msra.mxu0 %v828
        %1278 = vmatpush.msra.mxu0 %v825
        %1279 = vmatpush.msra.mxu0 %v822
        %1280 = vmatmul.f32.gmra.mxu0 %v1262
        %v1281 = vpop.f32.mrf.mxu0
        %v1282 = vadd.f32 0.0, %v1281
        %1283 = vdwg.mxu0
        %1284 = vxpose.xlu0.b32.start [1/16] %v738, 128
        %1285 = vxpose.xlu0.b32.cont [2/16] %v741, 128
        %1286 = vxpose.xlu0.b32.cont [3/16] %v744, 128
        %1287 = vxpose.xlu0.b32.cont [4/16] %v747, 128
        %1288 = vxpose.xlu0.b32.cont [5/16] 0.0, 128
        %1289 = vxpose.xlu0.b32.cont [6/16] 0.0, 128
        %1290 = vxpose.xlu0.b32.cont [7/16] 0.0, 128
        %1291 = vxpose.xlu0.b32.cont [8/16] 0.0, 128
        %1292 = vxpose.xlu0.b32.cont [9/16] 0.0, 128
        %1293 = vxpose.xlu0.b32.cont [10/16] 0.0, 128
        %1294 = vxpose.xlu0.b32.cont [11/16] 0.0, 128
        %1295 = vxpose.xlu0.b32.cont [12/16] 0.0, 128
        %1296 = vxpose.xlu0.b32.cont [13/16] 0.0, 128
        %1297 = vxpose.xlu0.b32.cont [14/16] 0.0, 128
        %1298 = vxpose.xlu0.b32.cont [15/16] 0.0, 128
        %1299 = vxpose.xlu0.b32.end [16/16] 0.0, 128
        %v1300 = vpop.trf.xlu0
        %v1301 = vpop.trf.xlu0
        %v1302 = vpop.trf.xlu0
        %v1303 = vpop.trf.xlu0
        %v1304 = vpop.trf.xlu0
        %v1305 = vpop.trf.xlu0
        %v1306 = vpop.trf.xlu0
        %v1307 = vpop.trf.xlu0
        %v1308 = vpop.trf.xlu0
        %v1309 = vpop.trf.xlu0
        %v1310 = vpop.trf.xlu0
        %v1311 = vpop.trf.xlu0
        %v1312 = vpop.trf.xlu0
        %v1313 = vpop.trf.xlu0
        %v1314 = vpop.trf.xlu0
        %v1315 = vpop.trf.xlu0
        %v1317 = vsel %vm985, %v1300, 0
        %1319 = vmatpush.msra.mxu0 0.0
        %1320 = vmatpush.msra.mxu0 0.0
        %1321 = vmatpush.msra.mxu0 0.0
        %1322 = vmatpush.msra.mxu0 0.0
        %1323 = vmatpush.msra.mxu0 0.0
        %1324 = vmatpush.msra.mxu0 0.0
        %1325 = vmatpush.msra.mxu0 0.0
        %1326 = vmatpush.msra.mxu0 0.0
        %1327 = vmatpush.msra.mxu0 0.0
        %1328 = vmatpush.msra.mxu0 0.0
        %1329 = vmatpush.msra.mxu0 0.0
        %1330 = vmatpush.msra.mxu0 0.0
        %1331 = vmatpush.msra.mxu0 %v843
        %1332 = vmatpush.msra.mxu0 %v840
        %1333 = vmatpush.msra.mxu0 %v837
        %1334 = vmatpush.msra.mxu0 %v834
        %1335 = vmatmul.f32.gmra.mxu0 %v1317
        %v1336 = vpop.f32.mrf.mxu0
        %v1337 = vadd.f32 0.0, %v1336
        %1338 = vdwg.mxu0
        %1339 = vxpose.xlu0.b32.start [1/16] %v750, 128
        %1340 = vxpose.xlu0.b32.cont [2/16] %v753, 128
        %1341 = vxpose.xlu0.b32.cont [3/16] %v756, 128
        %1342 = vxpose.xlu0.b32.cont [4/16] %v759, 128
        %1343 = vxpose.xlu0.b32.cont [5/16] 0.0, 128
        %1344 = vxpose.xlu0.b32.cont [6/16] 0.0, 128
        %1345 = vxpose.xlu0.b32.cont [7/16] 0.0, 128
        %1346 = vxpose.xlu0.b32.cont [8/16] 0.0, 128
        %1347 = vxpose.xlu0.b32.cont [9/16] 0.0, 128
        %1348 = vxpose.xlu0.b32.cont [10/16] 0.0, 128
        %1349 = vxpose.xlu0.b32.cont [11/16] 0.0, 128
        %1350 = vxpose.xlu0.b32.cont [12/16] 0.0, 128
        %1351 = vxpose.xlu0.b32.cont [13/16] 0.0, 128
        %1352 = vxpose.xlu0.b32.cont [14/16] 0.0, 128
        %1353 = vxpose.xlu0.b32.cont [15/16] 0.0, 128
        %1354 = vxpose.xlu0.b32.end [16/16] 0.0, 128
        %v1355 = vpop.trf.xlu0
        %v1356 = vpop.trf.xlu0
        %v1357 = vpop.trf.xlu0
        %v1358 = vpop.trf.xlu0
        %v1359 = vpop.trf.xlu0
        %v1360 = vpop.trf.xlu0
        %v1361 = vpop.trf.xlu0
        %v1362 = vpop.trf.xlu0
        %v1363 = vpop.trf.xlu0
        %v1364 = vpop.trf.xlu0
        %v1365 = vpop.trf.xlu0
        %v1366 = vpop.trf.xlu0
        %v1367 = vpop.trf.xlu0
        %v1368 = vpop.trf.xlu0
        %v1369 = vpop.trf.xlu0
        %v1370 = vpop.trf.xlu0
        %v1372 = vsel %vm985, %v1355, 0
        %1374 = vmatpush.msra.mxu0 0.0
        %1375 = vmatpush.msra.mxu0 0.0
        %1376 = vmatpush.msra.mxu0 0.0
        %1377 = vmatpush.msra.mxu0 0.0
        %1378 = vmatpush.msra.mxu0 0.0
        %1379 = vmatpush.msra.mxu0 0.0
        %1380 = vmatpush.msra.mxu0 0.0
        %1381 = vmatpush.msra.mxu0 0.0
        %1382 = vmatpush.msra.mxu0 0.0
        %1383 = vmatpush.msra.mxu0 0.0
        %1384 = vmatpush.msra.mxu0 0.0
        %1385 = vmatpush.msra.mxu0 0.0
        %1386 = vmatpush.msra.mxu0 %v855
        %1387 = vmatpush.msra.mxu0 %v852
        %1388 = vmatpush.msra.mxu0 %v849
        %1389 = vmatpush.msra.mxu0 %v846
        %1390 = vmatmul.f32.gmra.mxu0 %v1372
        %v1391 = vpop.f32.mrf.mxu0
        %v1392 = vadd.f32 0.0, %v1391
        %1393 = vdwg.mxu0
        %vm1394 = vcmask 64512
        %v1395 = vsel %vm1394, %v1007, -inf
        %1396 = vmax.xlane.f32.xlu0 %v1395
        %v1397 = vpop.xlane.xlu0 %1396
        %v1398 = vsel %vm1394, %v1062, -inf
        %1399 = vmax.xlane.f32.xlu0 %v1398
        %v1400 = vpop.xlane.xlu0 %1399
        %v1401 = vsel %vm1394, %v1117, -inf
        %1402 = vmax.xlane.f32.xlu0 %v1401
        %v1403 = vpop.xlane.xlu0 %1402
        %v1404 = vsel %vm1394, %v1172, -inf
        %1405 = vmax.xlane.f32.xlu0 %v1404
        %v1406 = vpop.xlane.xlu0 %1405
        %v1407 = vsel %vm1394, %v1227, -inf
        %1408 = vmax.xlane.f32.xlu0 %v1407
        %v1409 = vpop.xlane.xlu0 %1408
        %v1410 = vsel %vm1394, %v1282, -inf
        %1411 = vmax.xlane.f32.xlu0 %v1410
        %v1412 = vpop.xlane.xlu0 %1411
        %v1413 = vsel %vm1394, %v1337, -inf
        %1414 = vmax.xlane.f32.xlu0 %v1413
        %v1415 = vpop.xlane.xlu0 %1414
        %v1416 = vsel %vm1394, %v1392, -inf
        %1417 = vmax.xlane.f32.xlu0 %v1416
        %v1418 = vpop.xlane.xlu0 %1417
        %v1419 = vsub.f32 %v1007, %v1397
        %v1420 = vsub.f32 %v1062, %v1400
        %v1421 = vsub.f32 %v1117, %v1403
        %v1422 = vsub.f32 %v1172, %v1406
        %v1423 = vsub.f32 %v1227, %v1409
        %v1424 = vsub.f32 %v1282, %v1412
        %v1425 = vsub.f32 %v1337, %v1415
        %v1426 = vsub.f32 %v1392, %v1418
        %v1427 = vmul.f32 %v1419, 1.442695
        %v1428 = vpow.pop %v1427
        %v1429 = vmul.f32 %v1420, 1.442695
        %v1430 = vpow.pop %v1429
        %v1431 = vmul.f32 %v1421, 1.442695
        %v1432 = vpow.pop %v1431
        %v1433 = vmul.f32 %v1422, 1.442695
        %v1434 = vpow.pop %v1433
        %v1435 = vmul.f32 %v1423, 1.442695
        %v1436 = vpow.pop %v1435
        %v1437 = vmul.f32 %v1424, 1.442695
        %v1438 = vpow.pop %v1437
        %v1439 = vmul.f32 %v1425, 1.442695
        %v1440 = vpow.pop %v1439
        %v1441 = vmul.f32 %v1426, 1.442695
        %v1442 = vpow.pop %v1441
        %v1443 = vsel %vm1394, %v1428, 0.0
        %1444 = vadd.xlane.f32.xlu0 %v1443
        %v1445 = vpop.xlane.xlu0 %1444
        %v1446 = vsel %vm1394, %v1430, 0.0
        %1447 = vadd.xlane.f32.xlu0 %v1446
        %v1448 = vpop.xlane.xlu0 %1447
        %v1449 = vsel %vm1394, %v1432, 0.0
        %1450 = vadd.xlane.f32.xlu0 %v1449
        %v1451 = vpop.xlane.xlu0 %1450
        %v1452 = vsel %vm1394, %v1434, 0.0
        %1453 = vadd.xlane.f32.xlu0 %v1452
        %v1454 = vpop.xlane.xlu0 %1453
        %v1455 = vsel %vm1394, %v1436, 0.0
        %1456 = vadd.xlane.f32.xlu0 %v1455
        %v1457 = vpop.xlane.xlu0 %1456
        %v1458 = vsel %vm1394, %v1438, 0.0
        %1459 = vadd.xlane.f32.xlu0 %v1458
        %v1460 = vpop.xlane.xlu0 %1459
        %v1461 = vsel %vm1394, %v1440, 0.0
        %1462 = vadd.xlane.f32.xlu0 %v1461
        %v1463 = vpop.xlane.xlu0 %1462
        %v1464 = vsel %vm1394, %v1442, 0.0
        %1465 = vadd.xlane.f32.xlu0 %v1464
        %v1466 = vpop.xlane.xlu0 %1465
        %v1467 = vrcp.pop %v1445
        %v1468 = vmul.f32 %v1445, %v1467
        %v1469 = vsub.f32 1.0, %v1468
        %v1470 = vmul.f32 %v1467, %v1469
        %v1471 = vadd.f32 %v1467, %v1470
        %vm1472 = vweird.f32 %v1445
        %vm1473 = vweird.f32 %v1467
        %vm1474 = vmor %vm1472, %vm1473
        %v1475 = vsel %vm1474, %v1467, %v1471
        %v1476 = vand.u32 2147483647, %v1445
        %vm1477 = vcmp.eq.f32.partialorder %v1476, 8.507059e+37
        %v1478 = vand.u32 %v1445, 2147483648
        %v1479 = vor.u32 1.1754944e-38, %v1478
        %v1480 = vsel %vm1477, %v1479, %v1475
        %v1481 = vmul.f32 %v1428, %v1480
        %v1482 = vrcp.pop %v1448
        %v1483 = vmul.f32 %v1448, %v1482
        %v1484 = vsub.f32 1.0, %v1483
        %v1485 = vmul.f32 %v1482, %v1484
        %v1486 = vadd.f32 %v1482, %v1485
        %vm1487 = vweird.f32 %v1448
        %vm1488 = vweird.f32 %v1482
        %vm1489 = vmor %vm1487, %vm1488
        %v1490 = vsel %vm1489, %v1482, %v1486
        %v1491 = vand.u32 2147483647, %v1448
        %vm1492 = vcmp.eq.f32.partialorder %v1491, 8.507059e+37
        %v1493 = vand.u32 %v1448, 2147483648
        %v1494 = vor.u32 1.1754944e-38, %v1493
        %v1495 = vsel %vm1492, %v1494, %v1490
        %v1496 = vmul.f32 %v1430, %v1495
        %v1497 = vrcp.pop %v1451
        %v1498 = vmul.f32 %v1451, %v1497
        %v1499 = vsub.f32 1.0, %v1498
        %v1500 = vmul.f32 %v1497, %v1499
        %v1501 = vadd.f32 %v1497, %v1500
        %vm1502 = vweird.f32 %v1451
        %vm1503 = vweird.f32 %v1497
        %vm1504 = vmor %vm1502, %vm1503
        %v1505 = vsel %vm1504, %v1497, %v1501
        %v1506 = vand.u32 2147483647, %v1451
        %vm1507 = vcmp.eq.f32.partialorder %v1506, 8.507059e+37
        %v1508 = vand.u32 %v1451, 2147483648
        %v1509 = vor.u32 1.1754944e-38, %v1508
        %v1510 = vsel %vm1507, %v1509, %v1505
        %v1511 = vmul.f32 %v1432, %v1510
        %v1512 = vrcp.pop %v1454
        %v1513 = vmul.f32 %v1454, %v1512
        %v1514 = vsub.f32 1.0, %v1513
        %v1515 = vmul.f32 %v1512, %v1514
        %v1516 = vadd.f32 %v1512, %v1515
        %vm1517 = vweird.f32 %v1454
        %vm1518 = vweird.f32 %v1512
        %vm1519 = vmor %vm1517, %vm1518
        %v1520 = vsel %vm1519, %v1512, %v1516
        %v1521 = vand.u32 2147483647, %v1454
        %vm1522 = vcmp.eq.f32.partialorder %v1521, 8.507059e+37
        %v1523 = vand.u32 %v1454, 2147483648
        %v1524 = vor.u32 1.1754944e-38, %v1523
        %v1525 = vsel %vm1522, %v1524, %v1520
        %v1526 = vmul.f32 %v1434, %v1525
        %v1527 = vrcp.pop %v1457
        %v1528 = vmul.f32 %v1457, %v1527
        %v1529 = vsub.f32 1.0, %v1528
        %v1530 = vmul.f32 %v1527, %v1529
        %v1531 = vadd.f32 %v1527, %v1530
        %vm1532 = vweird.f32 %v1457
        %vm1533 = vweird.f32 %v1527
        %vm1534 = vmor %vm1532, %vm1533
        %v1535 = vsel %vm1534, %v1527, %v1531
        %v1536 = vand.u32 2147483647, %v1457
        %vm1537 = vcmp.eq.f32.partialorder %v1536, 8.507059e+37
        %v1538 = vand.u32 %v1457, 2147483648
        %v1539 = vor.u32 1.1754944e-38, %v1538
        %v1540 = vsel %vm1537, %v1539, %v1535
        %v1541 = vmul.f32 %v1436, %v1540
        %v1542 = vrcp.pop %v1460
        %v1543 = vmul.f32 %v1460, %v1542
        %v1544 = vsub.f32 1.0, %v1543
        %v1545 = vmul.f32 %v1542, %v1544
        %v1546 = vadd.f32 %v1542, %v1545
        %vm1547 = vweird.f32 %v1460
        %vm1548 = vweird.f32 %v1542
        %vm1549 = vmor %vm1547, %vm1548
        %v1550 = vsel %vm1549, %v1542, %v1546
        %v1551 = vand.u32 2147483647, %v1460
        %vm1552 = vcmp.eq.f32.partialorder %v1551, 8.507059e+37
        %v1553 = vand.u32 %v1460, 2147483648
        %v1554 = vor.u32 1.1754944e-38, %v1553
        %v1555 = vsel %vm1552, %v1554, %v1550
        %v1556 = vmul.f32 %v1438, %v1555
        %v1557 = vrcp.pop %v1463
        %v1558 = vmul.f32 %v1463, %v1557
        %v1559 = vsub.f32 1.0, %v1558
        %v1560 = vmul.f32 %v1557, %v1559
        %v1561 = vadd.f32 %v1557, %v1560
        %vm1562 = vweird.f32 %v1463
        %vm1563 = vweird.f32 %v1557
        %vm1564 = vmor %vm1562, %vm1563
        %v1565 = vsel %vm1564, %v1557, %v1561
        %v1566 = vand.u32 2147483647, %v1463
        %vm1567 = vcmp.eq.f32.partialorder %v1566, 8.507059e+37
        %v1568 = vand.u32 %v1463, 2147483648
        %v1569 = vor.u32 1.1754944e-38, %v1568
        %v1570 = vsel %vm1567, %v1569, %v1565
        %v1571 = vmul.f32 %v1440, %v1570
        %v1572 = vrcp.pop %v1466
        %v1573 = vmul.f32 %v1466, %v1572
        %v1574 = vsub.f32 1.0, %v1573
        %v1575 = vmul.f32 %v1572, %v1574
        %v1576 = vadd.f32 %v1572, %v1575
        %vm1577 = vweird.f32 %v1466
        %vm1578 = vweird.f32 %v1572
        %vm1579 = vmor %vm1577, %vm1578
        %v1580 = vsel %vm1579, %v1572, %v1576
        %v1581 = vand.u32 2147483647, %v1466
        %vm1582 = vcmp.eq.f32.partialorder %v1581, 8.507059e+37
        %v1583 = vand.u32 %v1466, 2147483648
        %v1584 = vor.u32 1.1754944e-38, %v1583
        %v1585 = vsel %vm1582, %v1584, %v1580
        %v1586 = vmul.f32 %v1442, %v1585
        %v1588 = vsel %vm1394, %v858, 0
        %v1591 = vsel %vm1394, %v861, 0
        %v1594 = vsel %vm1394, %v864, 0
        %v1597 = vsel %vm1394, %v867, 0
        %v1600 = vsel %vm1394, %v1481, 0
        %1602 = vmatpush.xpose.msra.mxu0 0.0
        %1603 = vmatpush.xpose.msra.mxu0 0.0
        %1604 = vmatpush.xpose.msra.mxu0 0.0
        %1605 = vmatpush.xpose.msra.mxu0 0.0
        %1606 = vmatpush.xpose.msra.mxu0 0.0
        %1607 = vmatpush.xpose.msra.mxu0 0.0
        %1608 = vmatpush.xpose.msra.mxu0 0.0
        %1609 = vmatpush.xpose.msra.mxu0 0.0
        %1610 = vmatpush.xpose.msra.mxu0 0.0
        %1611 = vmatpush.xpose.msra.mxu0 0.0
        %1612 = vmatpush.xpose.msra.mxu0 0.0
        %1613 = vmatpush.xpose.msra.mxu0 0.0
        %1614 = vmatpush.xpose.msra.mxu0 0.0
        %1615 = vmatpush.xpose.msra.mxu0 0.0
        %1616 = vmatpush.xpose.msra.mxu0 0.0
        %1617 = vmatpush.xpose.msra.mxu0 %v1600
        %1618 = vmatmul.f32.gmra.mxu0 %v1588
        %v1619 = vpop.f32.mrf.mxu0
        %v1620 = vadd.f32 0.0, %v1619
        %1621 = vmatmul.f32.gmra.mxu0 %v1591
        %v1622 = vpop.f32.mrf.mxu0
        %v1623 = vadd.f32 0.0, %v1622
        %1624 = vmatmul.f32.gmra.mxu0 %v1594
        %v1625 = vpop.f32.mrf.mxu0
        %v1626 = vadd.f32 0.0, %v1625
        %1627 = vmatmul.f32.gmra.mxu0 %v1597
        %v1628 = vpop.f32.mrf.mxu0
        %v1629 = vadd.f32 0.0, %v1628
        %1630 = vdwg.mxu0
        %v1632 = vsel %vm1394, %v870, 0
        %v1635 = vsel %vm1394, %v873, 0
        %v1638 = vsel %vm1394, %v876, 0
        %v1641 = vsel %vm1394, %v879, 0
        %v1644 = vsel %vm1394, %v1496, 0
        %1646 = vmatpush.xpose.msra.mxu0 0.0
        %1647 = vmatpush.xpose.msra.mxu0 0.0
        %1648 = vmatpush.xpose.msra.mxu0 0.0
        %1649 = vmatpush.xpose.msra.mxu0 0.0
        %1650 = vmatpush.xpose.msra.mxu0 0.0
        %1651 = vmatpush.xpose.msra.mxu0 0.0
        %1652 = vmatpush.xpose.msra.mxu0 0.0
        %1653 = vmatpush.xpose.msra.mxu0 0.0
        %1654 = vmatpush.xpose.msra.mxu0 0.0
        %1655 = vmatpush.xpose.msra.mxu0 0.0
        %1656 = vmatpush.xpose.msra.mxu0 0.0
        %1657 = vmatpush.xpose.msra.mxu0 0.0
        %1658 = vmatpush.xpose.msra.mxu0 0.0
        %1659 = vmatpush.xpose.msra.mxu0 0.0
        %1660 = vmatpush.xpose.msra.mxu0 0.0
        %1661 = vmatpush.xpose.msra.mxu0 %v1644
        %1662 = vmatmul.f32.gmra.mxu0 %v1632
        %v1663 = vpop.f32.mrf.mxu0
        %v1664 = vadd.f32 0.0, %v1663
        %1665 = vmatmul.f32.gmra.mxu0 %v1635
        %v1666 = vpop.f32.mrf.mxu0
        %v1667 = vadd.f32 0.0, %v1666
        %1668 = vmatmul.f32.gmra.mxu0 %v1638
        %v1669 = vpop.f32.mrf.mxu0
        %v1670 = vadd.f32 0.0, %v1669
        %1671 = vmatmul.f32.gmra.mxu0 %v1641
        %v1672 = vpop.f32.mrf.mxu0
        %v1673 = vadd.f32 0.0, %v1672
        %1674 = vdwg.mxu0
        %v1676 = vsel %vm1394, %v882, 0
        %v1679 = vsel %vm1394, %v885, 0
        %v1682 = vsel %vm1394, %v888, 0
        %v1685 = vsel %vm1394, %v891, 0
        %v1688 = vsel %vm1394, %v1511, 0
        %1690 = vmatpush.xpose.msra.mxu0 0.0
        %1691 = vmatpush.xpose.msra.mxu0 0.0
        %1692 = vmatpush.xpose.msra.mxu0 0.0
        %1693 = vmatpush.xpose.msra.mxu0 0.0
        %1694 = vmatpush.xpose.msra.mxu0 0.0
        %1695 = vmatpush.xpose.msra.mxu0 0.0
        %1696 = vmatpush.xpose.msra.mxu0 0.0
        %1697 = vmatpush.xpose.msra.mxu0 0.0
        %1698 = vmatpush.xpose.msra.mxu0 0.0
        %1699 = vmatpush.xpose.msra.mxu0 0.0
        %1700 = vmatpush.xpose.msra.mxu0 0.0
        %1701 = vmatpush.xpose.msra.mxu0 0.0
        %1702 = vmatpush.xpose.msra.mxu0 0.0
        %1703 = vmatpush.xpose.msra.mxu0 0.0
        %1704 = vmatpush.xpose.msra.mxu0 0.0
        %1705 = vmatpush.xpose.msra.mxu0 %v1688
        %1706 = vmatmul.f32.gmra.mxu0 %v1676
        %v1707 = vpop.f32.mrf.mxu0
        %v1708 = vadd.f32 0.0, %v1707
        %1709 = vmatmul.f32.gmra.mxu0 %v1679
        %v1710 = vpop.f32.mrf.mxu0
        %v1711 = vadd.f32 0.0, %v1710
        %1712 = vmatmul.f32.gmra.mxu0 %v1682
        %v1713 = vpop.f32.mrf.mxu0
        %v1714 = vadd.f32 0.0, %v1713
        %1715 = vmatmul.f32.gmra.mxu0 %v1685
        %v1716 = vpop.f32.mrf.mxu0
        %v1717 = vadd.f32 0.0, %v1716
        %1718 = vdwg.mxu0
        %v1720 = vsel %vm1394, %v894, 0
        %v1723 = vsel %vm1394, %v897, 0
        %v1726 = vsel %vm1394, %v900, 0
        %v1729 = vsel %vm1394, %v903, 0
        %v1732 = vsel %vm1394, %v1526, 0
        %1734 = vmatpush.xpose.msra.mxu0 0.0
        %1735 = vmatpush.xpose.msra.mxu0 0.0
        %1736 = vmatpush.xpose.msra.mxu0 0.0
        %1737 = vmatpush.xpose.msra.mxu0 0.0
        %1738 = vmatpush.xpose.msra.mxu0 0.0
        %1739 = vmatpush.xpose.msra.mxu0 0.0
        %1740 = vmatpush.xpose.msra.mxu0 0.0
        %1741 = vmatpush.xpose.msra.mxu0 0.0
        %1742 = vmatpush.xpose.msra.mxu0 0.0
        %1743 = vmatpush.xpose.msra.mxu0 0.0
        %1744 = vmatpush.xpose.msra.mxu0 0.0
        %1745 = vmatpush.xpose.msra.mxu0 0.0
        %1746 = vmatpush.xpose.msra.mxu0 0.0
        %1747 = vmatpush.xpose.msra.mxu0 0.0
        %1748 = vmatpush.xpose.msra.mxu0 0.0
        %1749 = vmatpush.xpose.msra.mxu0 %v1732
        %1750 = vmatmul.f32.gmra.mxu0 %v1720
        %v1751 = vpop.f32.mrf.mxu0
        %v1752 = vadd.f32 0.0, %v1751
        %1753 = vmatmul.f32.gmra.mxu0 %v1723
        %v1754 = vpop.f32.mrf.mxu0
        %v1755 = vadd.f32 0.0, %v1754
        %1756 = vmatmul.f32.gmra.mxu0 %v1726
        %v1757 = vpop.f32.mrf.mxu0
        %v1758 = vadd.f32 0.0, %v1757
        %1759 = vmatmul.f32.gmra.mxu0 %v1729
        %v1760 = vpop.f32.mrf.mxu0
        %v1761 = vadd.f32 0.0, %v1760
        %1762 = vdwg.mxu0
        %v1764 = vsel %vm1394, %v906, 0
        %v1767 = vsel %vm1394, %v909, 0
        %v1770 = vsel %vm1394, %v912, 0
        %v1773 = vsel %vm1394, %v915, 0
        %v1776 = vsel %vm1394, %v1541, 0
        %1778 = vmatpush.xpose.msra.mxu0 0.0
        %1779 = vmatpush.xpose.msra.mxu0 0.0
        %1780 = vmatpush.xpose.msra.mxu0 0.0
        %1781 = vmatpush.xpose.msra.mxu0 0.0
        %1782 = vmatpush.xpose.msra.mxu0 0.0
        %1783 = vmatpush.xpose.msra.mxu0 0.0
        %1784 = vmatpush.xpose.msra.mxu0 0.0
        %1785 = vmatpush.xpose.msra.mxu0 0.0
        %1786 = vmatpush.xpose.msra.mxu0 0.0
        %1787 = vmatpush.xpose.msra.mxu0 0.0
        %1788 = vmatpush.xpose.msra.mxu0 0.0
        %1789 = vmatpush.xpose.msra.mxu0 0.0
        %1790 = vmatpush.xpose.msra.mxu0 0.0
        %1791 = vmatpush.xpose.msra.mxu0 0.0
        %1792 = vmatpush.xpose.msra.mxu0 0.0
        %1793 = vmatpush.xpose.msra.mxu0 %v1776
        %1794 = vmatmul.f32.gmra.mxu0 %v1764
        %v1795 = vpop.f32.mrf.mxu0
        %v1796 = vadd.f32 0.0, %v1795
        %1797 = vmatmul.f32.gmra.mxu0 %v1767
        %v1798 = vpop.f32.mrf.mxu0
        %v1799 = vadd.f32 0.0, %v1798
        %1800 = vmatmul.f32.gmra.mxu0 %v1770
        %v1801 = vpop.f32.mrf.mxu0
        %v1802 = vadd.f32 0.0, %v1801
        %1803 = vmatmul.f32.gmra.mxu0 %v1773
        %v1804 = vpop.f32.mrf.mxu0
        %v1805 = vadd.f32 0.0, %v1804
        %1806 = vdwg.mxu0
        %v1808 = vsel %vm1394, %v918, 0
        %v1811 = vsel %vm1394, %v921, 0
        %v1814 = vsel %vm1394, %v924, 0
        %v1817 = vsel %vm1394, %v927, 0
        %v1820 = vsel %vm1394, %v1556, 0
        %1822 = vmatpush.xpose.msra.mxu0 0.0
        %1823 = vmatpush.xpose.msra.mxu0 0.0
        %1824 = vmatpush.xpose.msra.mxu0 0.0
        %1825 = vmatpush.xpose.msra.mxu0 0.0
        %1826 = vmatpush.xpose.msra.mxu0 0.0
        %1827 = vmatpush.xpose.msra.mxu0 0.0
        %1828 = vmatpush.xpose.msra.mxu0 0.0
        %1829 = vmatpush.xpose.msra.mxu0 0.0
        %1830 = vmatpush.xpose.msra.mxu0 0.0
        %1831 = vmatpush.xpose.msra.mxu0 0.0
        %1832 = vmatpush.xpose.msra.mxu0 0.0
        %1833 = vmatpush.xpose.msra.mxu0 0.0
        %1834 = vmatpush.xpose.msra.mxu0 0.0
        %1835 = vmatpush.xpose.msra.mxu0 0.0
        %1836 = vmatpush.xpose.msra.mxu0 0.0
        %1837 = vmatpush.xpose.msra.mxu0 %v1820
        %1838 = vmatmul.f32.gmra.mxu0 %v1808
        %v1839 = vpop.f32.mrf.mxu0
        %v1840 = vadd.f32 0.0, %v1839
        %1841 = vmatmul.f32.gmra.mxu0 %v1811
        %v1842 = vpop.f32.mrf.mxu0
        %v1843 = vadd.f32 0.0, %v1842
        %1844 = vmatmul.f32.gmra.mxu0 %v1814
        %v1845 = vpop.f32.mrf.mxu0
        %v1846 = vadd.f32 0.0, %v1845
        %1847 = vmatmul.f32.gmra.mxu0 %v1817
        %v1848 = vpop.f32.mrf.mxu0
        %v1849 = vadd.f32 0.0, %v1848
        %1850 = vdwg.mxu0
        %v1852 = vsel %vm1394, %v930, 0
        %v1855 = vsel %vm1394, %v933, 0
        %v1858 = vsel %vm1394, %v936, 0
        %v1861 = vsel %vm1394, %v939, 0
        %v1864 = vsel %vm1394, %v1571, 0
        %1866 = vmatpush.xpose.msra.mxu0 0.0
        %1867 = vmatpush.xpose.msra.mxu0 0.0
        %1868 = vmatpush.xpose.msra.mxu0 0.0
        %1869 = vmatpush.xpose.msra.mxu0 0.0
        %1870 = vmatpush.xpose.msra.mxu0 0.0
        %1871 = vmatpush.xpose.msra.mxu0 0.0
        %1872 = vmatpush.xpose.msra.mxu0 0.0
        %1873 = vmatpush.xpose.msra.mxu0 0.0
        %1874 = vmatpush.xpose.msra.mxu0 0.0
        %1875 = vmatpush.xpose.msra.mxu0 0.0
        %1876 = vmatpush.xpose.msra.mxu0 0.0
        %1877 = vmatpush.xpose.msra.mxu0 0.0
        %1878 = vmatpush.xpose.msra.mxu0 0.0
        %1879 = vmatpush.xpose.msra.mxu0 0.0
        %1880 = vmatpush.xpose.msra.mxu0 0.0
        %1881 = vmatpush.xpose.msra.mxu0 %v1864
        %1882 = vmatmul.f32.gmra.mxu0 %v1852
        %v1883 = vpop.f32.mrf.mxu0
        %v1884 = vadd.f32 0.0, %v1883
        %1885 = vmatmul.f32.gmra.mxu0 %v1855
        %v1886 = vpop.f32.mrf.mxu0
        %v1887 = vadd.f32 0.0, %v1886
        %1888 = vmatmul.f32.gmra.mxu0 %v1858
        %v1889 = vpop.f32.mrf.mxu0
        %v1890 = vadd.f32 0.0, %v1889
        %1891 = vmatmul.f32.gmra.mxu0 %v1861
        %v1892 = vpop.f32.mrf.mxu0
        %v1893 = vadd.f32 0.0, %v1892
        %1894 = vdwg.mxu0
        %v1896 = vsel %vm1394, %v942, 0
        %v1899 = vsel %vm1394, %v945, 0
        %v1902 = vsel %vm1394, %v948, 0
        %v1905 = vsel %vm1394, %v951, 0
        %v1908 = vsel %vm1394, %v1586, 0
        %1910 = vmatpush.xpose.msra.mxu0 0.0
        %1911 = vmatpush.xpose.msra.mxu0 0.0
        %1912 = vmatpush.xpose.msra.mxu0 0.0
        %1913 = vmatpush.xpose.msra.mxu0 0.0
        %1914 = vmatpush.xpose.msra.mxu0 0.0
        %1915 = vmatpush.xpose.msra.mxu0 0.0
        %1916 = vmatpush.xpose.msra.mxu0 0.0
        %1917 = vmatpush.xpose.msra.mxu0 0.0
        %1918 = vmatpush.xpose.msra.mxu0 0.0
        %1919 = vmatpush.xpose.msra.mxu0 0.0
        %1920 = vmatpush.xpose.msra.mxu0 0.0
        %1921 = vmatpush.xpose.msra.mxu0 0.0
        %1922 = vmatpush.xpose.msra.mxu0 0.0
        %1923 = vmatpush.xpose.msra.mxu0 0.0
        %1924 = vmatpush.xpose.msra.mxu0 0.0
        %1925 = vmatpush.xpose.msra.mxu0 %v1908
        %1926 = vmatmul.f32.gmra.mxu0 %v1896
        %v1927 = vpop.f32.mrf.mxu0
        %v1928 = vadd.f32 0.0, %v1927
        %1929 = vmatmul.f32.gmra.mxu0 %v1899
        %v1930 = vpop.f32.mrf.mxu0
        %v1931 = vadd.f32 0.0, %v1930
        %1932 = vmatmul.f32.gmra.mxu0 %v1902
        %v1933 = vpop.f32.mrf.mxu0
        %v1934 = vadd.f32 0.0, %v1933
        %1935 = vmatmul.f32.gmra.mxu0 %v1905
        %v1936 = vpop.f32.mrf.mxu0
        %v1937 = vadd.f32 0.0, %v1936
        %1938 = vdwg.mxu0
        %v1939 = vld [vmem:[#allocation7] sm:$0xff]
        %v1940 = vld [vmem:[#allocation7 + $0x8] sm:$0xff]
        %v1941 = vld [vmem:[#allocation7 + $0x10] sm:$0xff]
        %v1942 = vld [vmem:[#allocation7 + $0x18] sm:$0xff]
        %v1943 = vld [vmem:[#allocation7 + $0x20] sm:$0xff]
        %v1944 = vld [vmem:[#allocation7 + $0x28] sm:$0xff]
        %v1945 = vld [vmem:[#allocation7 + $0x30] sm:$0xff]
        %v1946 = vld [vmem:[#allocation7 + $0x38] sm:$0xff]
        %v1947 = vld [vmem:[#allocation7 + $0x40] sm:$0xff]
        %v1948 = vld [vmem:[#allocation7 + $0x48] sm:$0xff]
        %v1949 = vld [vmem:[#allocation7 + $0x50] sm:$0xff]
        %v1950 = vld [vmem:[#allocation7 + $0x58] sm:$0xff]
        %v1951 = vld [vmem:[#allocation7 + $0x60] sm:$0xff]
        %v1952 = vld [vmem:[#allocation7 + $0x68] sm:$0xff]
        %v1953 = vld [vmem:[#allocation7 + $0x70] sm:$0xff]
        %v1954 = vld [vmem:[#allocation7 + $0x78] sm:$0xff]
        %v1955 = vld [vmem:[#allocation7 + $0x80] sm:$0xff]
        %v1956 = vld [vmem:[#allocation7 + $0x88] sm:$0xff]
        %v1957 = vld [vmem:[#allocation7 + $0x90] sm:$0xff]
        %v1958 = vld [vmem:[#allocation7 + $0x98] sm:$0xff]
        %v1959 = vld [vmem:[#allocation7 + $0xa0] sm:$0xff]
        %v1960 = vld [vmem:[#allocation7 + $0xa8] sm:$0xff]
        %v1961 = vld [vmem:[#allocation7 + $0xb0] sm:$0xff]
        %v1962 = vld [vmem:[#allocation7 + $0xb8] sm:$0xff]
        %v1963 = vld [vmem:[#allocation7 + $0xc0] sm:$0xff]
        %v1964 = vld [vmem:[#allocation7 + $0xc8] sm:$0xff]
        %v1965 = vld [vmem:[#allocation7 + $0xd0] sm:$0xff]
        %v1966 = vld [vmem:[#allocation7 + $0xd8] sm:$0xff]
        %v1967 = vld [vmem:[#allocation7 + $0xe0] sm:$0xff]
        %v1968 = vld [vmem:[#allocation7 + $0xe8] sm:$0xff]
        %v1969 = vld [vmem:[#allocation7 + $0xf0] sm:$0xff]
        %v1970 = vld [vmem:[#allocation7 + $0xf8] sm:$0xff]
        %1971 = vmatpush.msra.mxu0 %v1761
        %1972 = vmatpush.msra.mxu0 %v1758
        %1973 = vmatpush.msra.mxu0 %v1755
        %1974 = vmatpush.msra.mxu0 %v1752
        %1975 = vmatpush.msra.mxu0 %v1717
        %1976 = vmatpush.msra.mxu0 %v1714
        %1977 = vmatpush.msra.mxu0 %v1711
        %1978 = vmatpush.msra.mxu0 %v1708
        %1979 = vmatpush.msra.mxu0 %v1673
        %1980 = vmatpush.msra.mxu0 %v1670
        %1981 = vmatpush.msra.mxu0 %v1667
        %1982 = vmatpush.msra.mxu0 %v1664
        %1983 = vmatpush.msra.mxu0 %v1629
        %1984 = vmatpush.msra.mxu0 %v1626
        %1985 = vmatpush.msra.mxu0 %v1623
        %1986 = vmatpush.msra.mxu0 %v1620
        %1987 = vmatmul.f32.gmra.mxu0 %v1939
        %v1988 = vpop.f32.mrf.mxu0
        %v1989 = vadd.f32 0.0, %v1988
        %1990 = vmatmul.f32.gmra.mxu0 %v1941
        %v1991 = vpop.f32.mrf.mxu0
        %v1992 = vadd.f32 0.0, %v1991
        %1993 = vmatmul.f32.gmra.mxu0 %v1943
        %v1994 = vpop.f32.mrf.mxu0
        %v1995 = vadd.f32 0.0, %v1994
        %1996 = vmatmul.f32.gmra.mxu0 %v1945
        %v1997 = vpop.f32.mrf.mxu0
        %v1998 = vadd.f32 0.0, %v1997
        %1999 = vmatmul.f32.gmra.mxu0 %v1947
        %v2000 = vpop.f32.mrf.mxu0
        %v2001 = vadd.f32 0.0, %v2000
        %2002 = vmatmul.f32.gmra.mxu0 %v1949
        %v2003 = vpop.f32.mrf.mxu0
        %v2004 = vadd.f32 0.0, %v2003
        %2005 = vmatmul.f32.gmra.mxu0 %v1951
        %v2006 = vpop.f32.mrf.mxu0
        %v2007 = vadd.f32 0.0, %v2006
        %2008 = vmatmul.f32.gmra.mxu0 %v1953
        %v2009 = vpop.f32.mrf.mxu0
        %v2010 = vadd.f32 0.0, %v2009
        %2011 = vmatmul.f32.gmra.mxu0 %v1955
        %v2012 = vpop.f32.mrf.mxu0
        %v2013 = vadd.f32 0.0, %v2012
        %2014 = vmatmul.f32.gmra.mxu0 %v1957
        %v2015 = vpop.f32.mrf.mxu0
        %v2016 = vadd.f32 0.0, %v2015
        %2017 = vmatmul.f32.gmra.mxu0 %v1959
        %v2018 = vpop.f32.mrf.mxu0
        %v2019 = vadd.f32 0.0, %v2018
        %2020 = vmatmul.f32.gmra.mxu0 %v1961
        %v2021 = vpop.f32.mrf.mxu0
        %v2022 = vadd.f32 0.0, %v2021
        %2023 = vmatmul.f32.gmra.mxu0 %v1963
        %v2024 = vpop.f32.mrf.mxu0
        %v2025 = vadd.f32 0.0, %v2024
        %2026 = vmatmul.f32.gmra.mxu0 %v1965
        %v2027 = vpop.f32.mrf.mxu0
        %v2028 = vadd.f32 0.0, %v2027
        %2029 = vmatmul.f32.gmra.mxu0 %v1967
        %v2030 = vpop.f32.mrf.mxu0
        %v2031 = vadd.f32 0.0, %v2030
        %2032 = vmatmul.f32.gmra.mxu0 %v1969
        %v2033 = vpop.f32.mrf.mxu0
        %v2034 = vadd.f32 0.0, %v2033
        %2035 = vdwg.mxu0
        %2036 = vmatpush.msra.mxu0 %v1937
        %2037 = vmatpush.msra.mxu0 %v1934
        %2038 = vmatpush.msra.mxu0 %v1931
        %2039 = vmatpush.msra.mxu0 %v1928
        %2040 = vmatpush.msra.mxu0 %v1893
        %2041 = vmatpush.msra.mxu0 %v1890
        %2042 = vmatpush.msra.mxu0 %v1887
        %2043 = vmatpush.msra.mxu0 %v1884
        %2044 = vmatpush.msra.mxu0 %v1849
        %2045 = vmatpush.msra.mxu0 %v1846
        %2046 = vmatpush.msra.mxu0 %v1843
        %2047 = vmatpush.msra.mxu0 %v1840
        %2048 = vmatpush.msra.mxu0 %v1805
        %2049 = vmatpush.msra.mxu0 %v1802
        %2050 = vmatpush.msra.mxu0 %v1799
        %2051 = vmatpush.msra.mxu0 %v1796
        %2052 = vmatmul.f32.gmra.mxu0 %v1940
        %v2053 = vpop.f32.mrf.mxu0
        %v2054 = vadd.f32 %v1989, %v2053
        %2055 = vmatmul.f32.gmra.mxu0 %v1942
        %v2056 = vpop.f32.mrf.mxu0
        %v2057 = vadd.f32 %v1992, %v2056
        %2058 = vmatmul.f32.gmra.mxu0 %v1944
        %v2059 = vpop.f32.mrf.mxu0
        %v2060 = vadd.f32 %v1995, %v2059
        %2061 = vmatmul.f32.gmra.mxu0 %v1946
        %v2062 = vpop.f32.mrf.mxu0
        %v2063 = vadd.f32 %v1998, %v2062
        %2064 = vmatmul.f32.gmra.mxu0 %v1948
        %v2065 = vpop.f32.mrf.mxu0
        %v2066 = vadd.f32 %v2001, %v2065
        %2067 = vmatmul.f32.gmra.mxu0 %v1950
        %v2068 = vpop.f32.mrf.mxu0
        %v2069 = vadd.f32 %v2004, %v2068
        %2070 = vmatmul.f32.gmra.mxu0 %v1952
        %v2071 = vpop.f32.mrf.mxu0
        %v2072 = vadd.f32 %v2007, %v2071
        %2073 = vmatmul.f32.gmra.mxu0 %v1954
        %v2074 = vpop.f32.mrf.mxu0
        %v2075 = vadd.f32 %v2010, %v2074
        %2076 = vmatmul.f32.gmra.mxu0 %v1956
        %v2077 = vpop.f32.mrf.mxu0
        %v2078 = vadd.f32 %v2013, %v2077
        %2079 = vmatmul.f32.gmra.mxu0 %v1958
        %v2080 = vpop.f32.mrf.mxu0
        %v2081 = vadd.f32 %v2016, %v2080
        %2082 = vmatmul.f32.gmra.mxu0 %v1960
        %v2083 = vpop.f32.mrf.mxu0
        %v2084 = vadd.f32 %v2019, %v2083
        %2085 = vmatmul.f32.gmra.mxu0 %v1962
        %v2086 = vpop.f32.mrf.mxu0
        %v2087 = vadd.f32 %v2022, %v2086
        %2088 = vmatmul.f32.gmra.mxu0 %v1964
        %v2089 = vpop.f32.mrf.mxu0
        %v2090 = vadd.f32 %v2025, %v2089
        %2091 = vmatmul.f32.gmra.mxu0 %v1966
        %v2092 = vpop.f32.mrf.mxu0
        %v2093 = vadd.f32 %v2028, %v2092
        %2094 = vmatmul.f32.gmra.mxu0 %v1968
        %v2095 = vpop.f32.mrf.mxu0
        %v2096 = vadd.f32 %v2031, %v2095
        %2097 = vmatmul.f32.gmra.mxu0 %v1970
        %v2098 = vpop.f32.mrf.mxu0
        %v2099 = vadd.f32 %v2034, %v2098
        %2100 = vdwg.mxu0
        %2101 = vxpose.xlu0.b32.start [1/16] %v2054, 128
        %2102 = vxpose.xlu0.b32.cont [2/16] %v2057, 128
        %2103 = vxpose.xlu0.b32.cont [3/16] %v2060, 128
        %2104 = vxpose.xlu0.b32.cont [4/16] %v2063, 128
        %2105 = vxpose.xlu0.b32.cont [5/16] %v2066, 128
        %2106 = vxpose.xlu0.b32.cont [6/16] %v2069, 128
        %2107 = vxpose.xlu0.b32.cont [7/16] %v2072, 128
        %2108 = vxpose.xlu0.b32.cont [8/16] %v2075, 128
        %2109 = vxpose.xlu0.b32.cont [9/16] %v2078, 128
        %2110 = vxpose.xlu0.b32.cont [10/16] %v2081, 128
        %2111 = vxpose.xlu0.b32.cont [11/16] %v2084, 128
        %2112 = vxpose.xlu0.b32.cont [12/16] %v2087, 128
        %2113 = vxpose.xlu0.b32.cont [13/16] %v2090, 128
        %2114 = vxpose.xlu0.b32.cont [14/16] %v2093, 128
        %2115 = vxpose.xlu0.b32.cont [15/16] %v2096, 128
        %2116 = vxpose.xlu0.b32.end [16/16] %v2099, 128
        %v2117 = vpop.trf.xlu0
        %v2118 = vpop.trf.xlu0
        %v2119 = vpop.trf.xlu0
        %v2120 = vpop.trf.xlu0
        %v2121 = vpop.trf.xlu0
        %v2122 = vpop.trf.xlu0
        %v2123 = vpop.trf.xlu0
        %v2124 = vpop.trf.xlu0
        %v2125 = vpop.trf.xlu0
        %v2126 = vpop.trf.xlu0
        %v2127 = vpop.trf.xlu0
        %v2128 = vpop.trf.xlu0
        %v2129 = vpop.trf.xlu0
        %v2130 = vpop.trf.xlu0
        %v2131 = vpop.trf.xlu0
        %v2132 = vpop.trf.xlu0
        %v2133 = vld [vmem:[%s5] sm:$0x1]
        %v2135 = vperm.slane %v2133, 0
        %v2137 = vadd.f32 %v2117, %v2135
        %v2138 = vlaneseq
        %v2139 = vand.u32 %v2138, 127
        %vm2140 = vcmp.lt.s32.totalorder %v2139, 32
        %v2141 = vadd.f32 %v2137, %v551
        %v2142 = vld [vmem:[%s6] sm:$0x1]
        %v2143 = vld [vmem:[%s7] sm:$0x1]
        %2144 = vadd.xlane.f32.xlu0 %v2141
        %v2145 = vpop.xlane.xlu0 %2144
        %v2146 = vmul.f32 %v2145, 0.03125
        %v2147 = vsub.f32 %v2141, %v2146
        %v2148 = vsel %vm2140, %v2147, 0.0
        %v2149 = vmul.f32 %v2148, %v2148
        %2150 = vadd.xlane.f32.xlu0 %v2149
        %v2151 = vpop.xlane.xlu0 %2150
        %v2152 = vmul.f32 %v2151, 0.03125
        %v2153 = vadd.f32 %v2152, 1e-05
        %v2154 = vrsqrt.pop %v2153
        %v2155 = vmul.f32 %v2154, %v2153
        %v2156 = vmul.f32 %v2155, %v2154
        %v2157 = vmul.f32 0.5, %v2156
        %v2158 = vsub.f32 1.5, %v2157
        %v2159 = vmul.f32 %v2154, %v2158
        %vm2160 = vweird.f32 %v2153
        %vm2161 = vweird.f32 %v2154
        %vm2162 = vmor %vm2160, %vm2161
        %v2163 = vsel %vm2162, %v2154, %v2159
        %v2164 = vmul.f32 %v2148, %v2163
        %v2166 = vperm.slane %v2142, 0
        %v2168 = vmul.f32 %v2164, %v2166
        %v2170 = vperm.slane %v2143, 0
        %v2172 = vadd.f32 %v2168, %v2170
        %v2173 = vld [vmem:[#allocation8] sm:$0xff]
        %v2174 = vld [vmem:[#allocation8 + $0x8] sm:$0xff]
        %v2175 = vld [vmem:[#allocation8 + $0x10] sm:$0xff]
        %v2176 = vld [vmem:[#allocation8 + $0x18] sm:$0xff]
        %v2177 = vld [vmem:[#allocation8 + $0x20] sm:$0xff]
        %v2178 = vld [vmem:[#allocation8 + $0x28] sm:$0xff]
        %v2179 = vld [vmem:[#allocation8 + $0x30] sm:$0xff]
        %v2180 = vld [vmem:[#allocation8 + $0x38] sm:$0xff]
        %v2181 = vld [vmem:[#allocation8 + $0x40] sm:$0xff]
        %v2182 = vld [vmem:[#allocation8 + $0x48] sm:$0xff]
        %v2183 = vld [vmem:[#allocation8 + $0x50] sm:$0xff]
        %v2184 = vld [vmem:[#allocation8 + $0x58] sm:$0xff]
        %v2185 = vld [vmem:[#allocation8 + $0x60] sm:$0xff]
        %v2186 = vld [vmem:[#allocation8 + $0x68] sm:$0xff]
        %v2187 = vld [vmem:[#allocation8 + $0x70] sm:$0xff]
        %v2188 = vld [vmem:[#allocation8 + $0x78] sm:$0xff]
        %v2189 = vld [vmem:[%s9] sm:$0x1]
        %v2191 = vperm.slane %v2189, 0
        %2193 = vmatpush.msra.mxu0 %v2188
        %2194 = vmatpush.msra.mxu0 %v2187
        %2195 = vmatpush.msra.mxu0 %v2186
        %2196 = vmatpush.msra.mxu0 %v2185
        %2197 = vmatpush.msra.mxu0 %v2184
        %2198 = vmatpush.msra.mxu0 %v2183
        %2199 = vmatpush.msra.mxu0 %v2182
        %2200 = vmatpush.msra.mxu0 %v2181
        %2201 = vmatpush.msra.mxu0 %v2180
        %2202 = vmatpush.msra.mxu0 %v2179
        %2203 = vmatpush.msra.mxu0 %v2178
        %2204 = vmatpush.msra.mxu0 %v2177
        %2205 = vmatpush.msra.mxu0 %v2176
        %2206 = vmatpush.msra.mxu0 %v2175
        %2207 = vmatpush.msra.mxu0 %v2174
        %2208 = vmatpush.msra.mxu0 %v2173
        %2209 = vmatmul.f32.gmra.mxu0 %v2172
        %v2210 = vpop.f32.mrf.mxu0
        %v2211 = vadd.f32 %v2191, %v2210
        %2212 = vdwg.mxu0
        %v2213 = vmax.f32 %v2211, 0.0
        %v2214 = vld [vmem:[#allocation10] sm:$0xff]
        %v2215 = vld [vmem:[#allocation10 + $0x8] sm:$0xff]
        %v2216 = vld [vmem:[#allocation10 + $0x10] sm:$0xff]
        %v2217 = vld [vmem:[#allocation10 + $0x18] sm:$0xff]
        %v2218 = vld [vmem:[#allocation10 + $0x20] sm:$0xff]
        %v2219 = vld [vmem:[#allocation10 + $0x28] sm:$0xff]
        %v2220 = vld [vmem:[#allocation10 + $0x30] sm:$0xff]
        %v2221 = vld [vmem:[#allocation10 + $0x38] sm:$0xff]
        %v2222 = vld [vmem:[#allocation10 + $0x40] sm:$0xff]
        %v2223 = vld [vmem:[#allocation10 + $0x48] sm:$0xff]
        %v2224 = vld [vmem:[#allocation10 + $0x50] sm:$0xff]
        %v2225 = vld [vmem:[#allocation10 + $0x58] sm:$0xff]
        %v2226 = vld [vmem:[#allocation10 + $0x60] sm:$0xff]
        %v2227 = vld [vmem:[#allocation10 + $0x68] sm:$0xff]
        %v2228 = vld [vmem:[#allocation10 + $0x70] sm:$0xff]
        %v2229 = vld [vmem:[#allocation10 + $0x78] sm:$0xff]
        %v2230 = vld [vmem:[%s11] sm:$0x1]
        %v2232 = vperm.slane %v2230, 0
        %2234 = vmatpush.msra.mxu0 %v2229
        %2235 = vmatpush.msra.mxu0 %v2228
        %2236 = vmatpush.msra.mxu0 %v2227
        %2237 = vmatpush.msra.mxu0 %v2226
        %2238 = vmatpush.msra.mxu0 %v2225
        %2239 = vmatpush.msra.mxu0 %v2224
        %2240 = vmatpush.msra.mxu0 %v2223
        %2241 = vmatpush.msra.mxu0 %v2222
        %2242 = vmatpush.msra.mxu0 %v2221
        %2243 = vmatpush.msra.mxu0 %v2220
        %2244 = vmatpush.msra.mxu0 %v2219
        %2245 = vmatpush.msra.mxu0 %v2218
        %2246 = vmatpush.msra.mxu0 %v2217
        %2247 = vmatpush.msra.mxu0 %v2216
        %2248 = vmatpush.msra.mxu0 %v2215
        %2249 = vmatpush.msra.mxu0 %v2214
        %2250 = vmatmul.f32.gmra.mxu0 %v2213
        %v2251 = vpop.f32.mrf.mxu0
        %v2252 = vadd.f32 %v2232, %v2251
        %2253 = vdwg.mxu0
        %v2254 = vadd.f32 %v2252, %v2172
        %v2255 = vld [vmem:[%s12] sm:$0x1]
        %v2256 = vld [vmem:[%s13] sm:$0x1]
        %2257 = vadd.xlane.f32.xlu0 %v2254
        %v2258 = vpop.xlane.xlu0 %2257
        %v2259 = vmul.f32 %v2258, 0.03125
        %v2260 = vsub.f32 %v2254, %v2259
        %v2261 = vsel %vm2140, %v2260, 0.0
        %v2262 = vmul.f32 %v2261, %v2261
        %2263 = vadd.xlane.f32.xlu0 %v2262
        %v2264 = vpop.xlane.xlu0 %2263
        %v2265 = vmul.f32 %v2264, 0.03125
        %v2266 = vadd.f32 %v2265, 1e-05
        %v2267 = vrsqrt.pop %v2266
        %v2268 = vmul.f32 %v2267, %v2266
        %v2269 = vmul.f32 %v2268, %v2267
        %v2270 = vmul.f32 0.5, %v2269
        %v2271 = vsub.f32 1.5, %v2270
        %v2272 = vmul.f32 %v2267, %v2271
        %vm2273 = vweird.f32 %v2266
        %vm2274 = vweird.f32 %v2267
        %vm2275 = vmor %vm2273, %vm2274
        %v2276 = vsel %vm2275, %v2267, %v2272
        %v2277 = vmul.f32 %v2261, %v2276
        %v2279 = vperm.slane %v2255, 0
        %v2281 = vmul.f32 %v2277, %v2279
        %v2283 = vperm.slane %v2256, 0
        %v2285 = vadd.f32 %v2281, %v2283
        %2286 = vst [vmem:[%s550] sm:$0xff] %v2285
        %s2287 = sand.u32 %s340, 1
        %s2288 = scalar_lea.sflag [#allocation4], %s2287
        %s2289 = sand.u32 %s340, 1
        %s2290 = smul.addr %s2289, 8
        %s2291 = scalar_lea.vmem [#allocation11], %s2290
        // Predicated region
        $region97: #{tpu_custom_call.1} parent=75 // pred_check
          %p2292 = pneg %p350
        $region98: #{tpu_custom_call.1} parent=75 // pred_check_branch
          %2294 = sbr.rel (%p2292) target = $region100
        $region99: #{tpu_custom_call.1} parent=75 // pred_region
          %2296 = vsyncadd %s2288, 0
          %s2297 = smul.addr %s33, 8
          %s2298 = scalar_lea.hbm %s14, %s2297
          %s2300 = sshll.u32 %s2291, 4
          %s2301 = int_to_ptr.vmem [resolvable:$true] %s2300
          %s2302 = sshll.u32 %s2298, 4
          %s2303 = int_to_ptr.hbm [resolvable:$true] %s2302
          %2305 = dma.vmem_to_hbm [thread:$0]  %s2301, 128, %s2303, %s2288
        $region100: #{tpu_custom_call.1} parent=75 // pred_fallthru
          _
      $region76: #{tpu_custom_call.1} parent=5 // pred_fallthru
        _
      %p2306 = scmp.le.s32.totalorder 2, %s28
      // Predicated region
      $region101: #{tpu_custom_call.1} parent=5 // pred_check
        %p2307 = pneg %p2306
      $region102: #{tpu_custom_call.1} parent=5 // pred_check_branch
        %2309 = sbr.rel (%p2307) target = $region104
      $region103: #{tpu_custom_call.1} parent=5 // pred_region
        %s2310 = ssub.s32 %s28, 2
        // Predicated region
        $region105: #{tpu_custom_call.1} parent=103 // pred_check
          %p2311 = pneg %p356
        $region106: #{tpu_custom_call.1} parent=103 // pred_check_branch
          %2313 = sbr.rel (%p2311) target = $region108
        $region107: #{tpu_custom_call.1} parent=103 // pred_region
          %s2314 = sand.u32 %s341, 1
          %s2315 = scalar_lea.sflag [#allocation4], %s2314
          %s2316 = sand.u32 %s341, 1
          %s2317 = smul.addr %s2316, 8
          %s2318 = scalar_lea.vmem [#allocation11], %s2317
          %2320 = dma.done %s2315, 128
        $region108: #{tpu_custom_call.1} parent=103 // pred_fallthru
          _
      $region104: #{tpu_custom_call.1} parent=5 // pred_fallthru
        _
    $region6: #{tpu_custom_call.1} parent=1 // loop_footer
      %s32 = sadd.s32 1, %s28
    $region7: #{tpu_custom_call.1} parent=1 // loop_footer_branch
      %27 = sbr.rel target = $region3
    $region8: #{tpu_custom_call.1} parent=1 // loop_exit
      _
    %2321 = vsyncpa [#allocation3], 1
    %s2322 = scalar_lea.sflag [#allocation3], 1
    %2323 = vsyncpa %s2322, 1
    %2324 = vsyncpa [#allocation6], 1
    %2325 = vsyncpa [#allocation9], 1
    %2326 = vsyncpa [#allocation4], 1
    %s2327 = scalar_lea.sflag [#allocation4], 1
    %2328 = vsyncpa %s2327, 1

</llo_original>
